<compile_context>
chip_gen: v7x
topology: tpu7x:2x2x1
jax: 0.10.0
libtpu: 0.0.40
codegen_flags: <defaults>
</compile_context>

<pallas_src>
import jax
import jax.numpy as jnp
from jax.experimental import pallas as pl
from jax.experimental.pallas import tpu as pltpu

HIDDEN = 64


# ----------------------------------------------------------------------------
# Pallas kernel
# ----------------------------------------------------------------------------
def rnn_kernel(x_ref,              # (T*B, D)  bf16, flattened in the wrapper
               wih_ref,            # (D, 4H)   bf16, forward fused input proj
               bih_ref,            # (1, 4H)   f32,  forward fused bias (b_ih+b_hh)
               whh_ref,            # (H, 4H)   bf16, forward recurrent weights
               wir_ref,            # (D, 4H)   bf16, reverse fused input proj
               bir_ref,            # (1, 4H)   f32,  reverse fused bias
               w1f_ref, w1b_ref, b1_ref,      # fc head (w1 split by direction)
               w2_ref, b2_ref, w3_ref, b3_ref,
               out_ref,
               proj_ref):          # VMEM scratch (T*B, 4H) f32
    TB, _ = x_ref.shape
    H = whh_ref.shape[0]
    B = out_ref.shape[0]
    T = TB // B

    # One forward-only up-front projection for every timestep:
    #   (T*B, D) @ (D, 4H) + (1, 4H); bf16 MXU operands, f32 accumulate.
    # Bias folded here so the recurrence body never re-broadcasts it.
    proj_ref[...] = (jnp.dot(x_ref[...], wih_ref[...],
                             preferred_element_type=jnp.float32)
                     + bih_ref[...])

    whh = whh_ref[...]             # (H, 4H) bf16, stays live across the loop

    def apply_gates(gates, c):
        # Lane order (repacked in the wrapper): i, f, o, g — one contiguous
        # sigmoid slab (B,3H), one tanh slab (B,H); slice i/f/o afterwards.
        s = jax.nn.sigmoid(gates[:, :3 * H])
        g = jnp.tanh(gates[:, 3 * H:4 * H])
        i = s[:, 0 * H:1 * H]
        f = s[:, 1 * H:2 * H]
        o = s[:, 2 * H:3 * H]
        c_new = f * c + i * g
        h_new = o * jnp.tanh(c_new)
        return h_new, c_new

    h0 = jnp.zeros((B, H), jnp.float32)
    c0 = jnp.zeros((B, H), jnp.float32)

    # Forward recurrence: exactly one (B,H)@(H,4H) bf16 MXU op per serial step.
    def body(t, carry):
        h, c = carry
        row = proj_ref[pl.ds(pl.multiple_of(t * B, B), B), :]      # (B, 4H) f32
        gates = row + jnp.dot(h.astype(jnp.bfloat16), whh,
                              preferred_element_type=jnp.float32)
        return apply_gates(gates, c)

    # T=8: full unroll is fine; switch to a bounded unroll factor if T grows.
    h_fwd, _ = jax.lax.fori_loop(0, T, body, (h0, c0), unroll=True)

    # Reverse direction: output[-1] only needs the first backward step applied
    # to x[T-1] from a zero state, so h @ Whh_r vanishes entirely — one tiny
    # (B, D) @ (D, 4H) matmul covers it.
    x_last = x_ref[pl.ds((T - 1) * B, B), :]
    gates_r = (jnp.dot(x_last, wir_ref[...],
                       preferred_element_type=jnp.float32) + bir_ref[...])
    h_bwd, _ = apply_gates(gates_r, c0)

    # fc head: Linear(128,64) -> ReLU -> Linear(64,32) -> ReLU -> Linear(32,C)
    # w1 split per direction avoids a 64+64 lane concat; kept in f32.
    z = jnp.maximum(
        jnp.dot(h_fwd, w1f_ref[...], preferred_element_type=jnp.float32)
        + jnp.dot(h_bwd, w1b_ref[...], preferred_element_type=jnp.float32)
        + b1_ref[...], 0.0)
    z = jnp.maximum(
        jnp.dot(z, w2_ref[...], preferred_element_type=jnp.float32)
        + b2_ref[...], 0.0)
    out = (jnp.dot(z, w3_ref[...], preferred_element_type=jnp.float32)
           + b3_ref[...])
    out_ref[...] = out.astype(out_ref.dtype)


# ----------------------------------------------------------------------------
# Wrapper: repack per-gate weights into fused lane-dense layouts, flatten x,
# pre-cast MXU operands to bf16, then call the kernel.
# ----------------------------------------------------------------------------
def rnn_forward(x, params):
    T, B, D = x.shape
    H = HIDDEN
    num_classes = params["w3"].shape[-1]

    # PyTorch gate order is (i, f, g, o); repack lanes to (i, f, o, g) so the
    # kernel applies sigmoid to one contiguous 3H slab and tanh to the last H.
    order = jnp.array([0, 1, 3, 2])

    def fuse_dir(wih, whh, b):
        # (4, D, H) -> (D, 4H);  (4, H, H) -> (H, 4H);  (4, 1, H) -> (1, 4H)
        d = wih.shape[1]
        wih_fused = jnp.transpose(wih[order], (1, 0, 2)).reshape(d, 4 * H)
        whh_fused = jnp.transpose(whh[order], (1, 0, 2)).reshape(H, 4 * H)
        b_fused = b[order].reshape(1, 4 * H)
        return wih_fused, whh_fused, b_fused

    wih_fw, whh_fw, b_fw = fuse_dir(params["wih_f"], params["whh_f"], params["b_f"])
    wih_rv, _, b_rv = fuse_dir(params["wih_r"], params["whh_r"], params["b_r"])

    # Flatten in the wrapper: folds into the HBM->VMEM DMA instead of an
    # in-kernel sublane-merging relayout.  bf16 MXU operands, f32 elsewhere.
    x_flat = x.reshape(T * B, D).astype(jnp.bfloat16)

    w1_f = params["w1"][:H]                                    # (H, 64)
    w1_b = params["w1"][H:]                                    # (H, 64)

    args = (x_flat,
            wih_fw.astype(jnp.bfloat16), b_fw,
            whh_fw.astype(jnp.bfloat16),
            wih_rv.astype(jnp.bfloat16), b_rv,
            w1_f, w1_b, params["b1"],
            params["w2"], params["b2"],
            params["w3"], params["b3"])

    vmem = pl.BlockSpec(memory_space=pltpu.MemorySpace.VMEM)
    return pl.pallas_call(
        rnn_kernel,
        out_shape=jax.ShapeDtypeStruct((B, num_classes), jnp.float32),
        in_specs=[vmem] * len(args),
        out_specs=vmem,
        scratch_shapes=[pltpu.VMEM((T * B, 4 * H), jnp.float32)],
        compiler_params=pltpu.CompilerParams(
            vmem_limit_bytes=32 * 1024 * 1024),
    )(*args)


# ----------------------------------------------------------------------------
# Deterministic parameter construction (PyTorch-style shapes, then stacked
# per-gate; the wrapper does the final kernel fusion / reordering).
# ----------------------------------------------------------------------------
def init_params(key, input_size, num_classes, hidden=HIDDEN):
    ks = jax.random.split(key, 16)

    def uni(k, shape, bound):
        return jax.random.uniform(k, shape, jnp.float32, -bound, bound)

    kb = 1.0 / jnp.sqrt(hidden)

    def lstm_dir(k0, k1, k2, k3):
        w_ih = uni(k0, (4 * hidden, input_size), kb)   # PyTorch layout (4H, D)
        w_hh = uni(k1, (4 * hidden, hidden), kb)       # (4H, H)
        b_ih = uni(k2, (4 * hidden,), kb)
        b_hh = uni(k3, (4 * hidden,), kb)
        # Gates stacked on leading axis (PyTorch order i,f,g,o), transposed for
        # right-multiplication: (4, D, H), (4, H, H), (4, 1, H).
        wih = jnp.transpose(w_ih.reshape(4, hidden, input_size), (0, 2, 1))
        whh = jnp.transpose(w_hh.reshape(4, hidden, hidden), (0, 2, 1))
        b = (b_ih + b_hh).reshape(4, 1, hidden)
        return wih, whh, b

    wih_f, whh_f, b_f = lstm_dir(ks[0], ks[1], ks[2], ks[3])
    wih_r, whh_r, b_r = lstm_dir(ks[4], ks[5], ks[6], ks[7])

    def linear(kw, kb_, fan_in, fan_out):
        bound = 1.0 / jnp.sqrt(fan_in)
        w = uni(kw, (fan_out, fan_in), bound)          # PyTorch layout (out, in)
        b = uni(kb_, (fan_out,), bound)
        return w.T, b.reshape(1, fan_out)              # kernel layout (in, out)

    w1, b1 = linear(ks[8], ks[9], 2 * hidden, hidden)
    w2, b2 = linear(ks[10], ks[11], hidden, 32)
    w3, b3 = linear(ks[12], ks[13], 32, num_classes)

    return dict(wih_f=wih_f, whh_f=whh_f, b_f=b_f,
                wih_r=wih_r, whh_r=whh_r, b_r=b_r,
                w1=w1, b1=b1, w2=w2, b2=b2, w3=w3, b3=b3)


# ----------------------------------------------------------------------------
# Pure-JAX f32 reference (full bidirectional LSTM, PyTorch semantics)
# ----------------------------------------------------------------------------
def reference(x, p):
    def run_dir(x_seq, wih, whh, b, reverse):
        T, B, D = x_seq.shape
        H = whh.shape[-1]

        def cell(carry, x_t):
            h, c = carry
            i = jax.nn.sigmoid(x_t @ wih[0] + h @ whh[0] + b[0])
            f = jax.nn.sigmoid(x_t @ wih[1] + h @ whh[1] + b[1])
            g = jnp.tanh(x_t @ wih[2] + h @ whh[2] + b[2])
            o = jax.nn.sigmoid(x_t @ wih[3] + h @ whh[3] + b[3])
            c = f * c + i * g
            h = o * jnp.tanh(c)
            return (h, c), h

        xs = x_seq[::-1] if reverse else x_seq
        _, hs = jax.lax.scan(cell, (jnp.zeros((B, H)), jnp.zeros((B, H))), xs)
        return hs[::-1] if reverse else hs   # hidden state at each time index

    hs_f = run_dir(x, p["wih_f"], p["whh_f"], p["b_f"], reverse=False)
    hs_b = run_dir(x, p["wih_r"], p["whh_r"], p["b_r"], reverse=True)
    feat = jnp.concatenate([hs_f[-1], hs_b[-1]], axis=-1)    # output[-1]
    z = jnp.maximum(feat @ p["w1"] + p["b1"], 0.0)
    z = jnp.maximum(z @ p["w2"] + p["b2"], 0.0)
    return z @ p["w3"] + p["b3"]


if __name__ == "__main__":
    T, B, D, C = 8, 8, 16, 10          # seq, batch, input_size, num_classes
    key = jax.random.PRNGKey(0)
    kx, kp = jax.random.split(key)
    x = jax.random.normal(kx, (T, B, D), jnp.float32)
    params = init_params(kp, D, C)

    out = rnn_forward(x, params)
    out = jax.block_until_ready(out)

    ref = reference(x, params)
    assert out.shape == (B, C)
    assert bool(jnp.all(jnp.isfinite(out)))
    assert bool(jnp.allclose(out, ref, rtol=5e-3, atol=5e-3)), (
        "mismatch vs pure-JAX reference")
    print("KERNEL_OK")
</pallas_src>

<mosaic_0001>
module attributes {stable_mosaic.version = 11 : i64} {
  func.func @rnn_kernel(%arg0: memref<64x16xbf16, #tpu.memory_space<vmem>>, %arg1: memref<16x256xbf16, #tpu.memory_space<vmem>>, %arg2: memref<1x256xf32, #tpu.memory_space<vmem>>, %arg3: memref<64x256xbf16, #tpu.memory_space<vmem>>, %arg4: memref<16x256xbf16, #tpu.memory_space<vmem>>, %arg5: memref<1x256xf32, #tpu.memory_space<vmem>>, %arg6: memref<64x64xf32, #tpu.memory_space<vmem>>, %arg7: memref<64x64xf32, #tpu.memory_space<vmem>>, %arg8: memref<1x64xf32, #tpu.memory_space<vmem>>, %arg9: memref<64x32xf32, #tpu.memory_space<vmem>>, %arg10: memref<1x32xf32, #tpu.memory_space<vmem>>, %arg11: memref<32x10xf32, #tpu.memory_space<vmem>>, %arg12: memref<1x10xf32, #tpu.memory_space<vmem>>, %arg13: memref<8x10xf32, #tpu.memory_space<vmem>>, %arg14: memref<64x256xf32, #tpu.memory_space<vmem>>) attributes {dimension_semantics = [], scalar_prefetch = 0 : i64, scratch_operands = 1 : i64, tpu.core_type = #tpu.core_type<tc>} {
    %c0 = arith.constant 0 : index
    %c0_0 = arith.constant 0 : index
    %0 = vector.load %arg0[%c0, %c0_0] : memref<64x16xbf16, #tpu.memory_space<vmem>>, vector<64x16xbf16>
    %c0_1 = arith.constant 0 : index
    %c0_2 = arith.constant 0 : index
    %1 = vector.load %arg1[%c0_1, %c0_2] : memref<16x256xbf16, #tpu.memory_space<vmem>>, vector<16x256xbf16>
    %cst = arith.constant dense<0.000000e+00> : vector<64x256xf32>
    %2 = tpu.matmul %0, %1, %cst {dimension_numbers = #tpu.dot_dimension_numbers<[1], [0], [0], [1], [0, 0, 1, 1], [], []>} : vector<64x16xbf16>, vector<16x256xbf16>, vector<64x256xf32> -> vector<64x256xf32>
    %c0_3 = arith.constant 0 : index
    %c0_4 = arith.constant 0 : index
    %3 = vector.load %arg2[%c0_3, %c0_4] : memref<1x256xf32, #tpu.memory_space<vmem>>, vector<1x256xf32>
    %4 = vector.broadcast %3 : vector<1x256xf32> to vector<64x256xf32>
    %5 = arith.addf %2, %4 : vector<64x256xf32>
    %c0_5 = arith.constant 0 : index
    %c0_6 = arith.constant 0 : index
    %6 = vector.load %arg14[%c0_5, %c0_6] : memref<64x256xf32, #tpu.memory_space<vmem>>, vector<64x256xf32>
    tpu.vector_store %arg14[%c0_5, %c0_6], %5 {strides = array<i32>} : memref<64x256xf32, #tpu.memory_space<vmem>>, vector<64x256xf32>,
    %c0_7 = arith.constant 0 : index
    %c0_8 = arith.constant 0 : index
    %7 = vector.load %arg3[%c0_7, %c0_8] : memref<64x256xbf16, #tpu.memory_space<vmem>>, vector<64x256xbf16>
    %cst_9 = arith.constant 0.000000e+00 : f32
    %8 = vector.broadcast %cst_9 : f32 to vector<8x64xf32>
    %cst_10 = arith.constant 0.000000e+00 : f32
    %9 = vector.broadcast %cst_10 : f32 to vector<8x64xf32>
    %c0_i32 = arith.constant 0 : i32
    %c8_i32 = arith.constant 8 : i32
    %10 = arith.muli %c0_i32, %c8_i32 : i32
    %11 = tpu.assume_multiple %10, 8 : i32
    %12 = arith.index_cast %11 : i32 to index
    %c0_11 = arith.constant 0 : index
    %13 = vector.load %arg14[%12, %c0_11] : memref<64x256xf32, #tpu.memory_space<vmem>>, vector<8x256xf32>
    %14 = arith.truncf %8 : vector<8x64xf32> to vector<8x64xbf16>
    %cst_12 = arith.constant dense<0.000000e+00> : vector<8x256xf32>
    %15 = tpu.matmul %14, %7, %cst_12 {dimension_numbers = #tpu.dot_dimension_numbers<[1], [0], [0], [1], [0, 0, 1, 1], [], []>} : vector<8x64xbf16>, vector<64x256xbf16>, vector<8x256xf32> -> vector<8x256xf32>
    %16 = arith.addf %13, %15 : vector<8x256xf32>
    %17 = vector.extract_strided_slice %16 {offsets = [0, 0], sizes = [8, 192], strides = [1, 1]} : vector<8x256xf32> to vector<8x192xf32>
    %18 = arith.negf %17 : vector<8x192xf32>
    %19 = math.exp %18 : vector<8x192xf32>
    %cst_13 = arith.constant 1.000000e+00 : f32
    %20 = vector.broadcast %cst_13 : f32 to vector<8x192xf32>
    %21 = arith.addf %20, %19 : vector<8x192xf32>
    %22 = arith.divf %20, %21 : vector<8x192xf32>
    %23 = vector.extract_strided_slice %16 {offsets = [0, 192], sizes = [8, 64], strides = [1, 1]} : vector<8x256xf32> to vector<8x64xf32>
    %24 = math.tanh %23 : vector<8x64xf32>
    %25 = vector.extract_strided_slice %22 {offsets = [0, 0], sizes = [8, 64], strides = [1, 1]} : vector<8x192xf32> to vector<8x64xf32>
    %26 = vector.extract_strided_slice %22 {offsets = [0, 64], sizes = [8, 64], strides = [1, 1]} : vector<8x192xf32> to vector<8x64xf32>
    %27 = vector.extract_strided_slice %22 {offsets = [0, 128], sizes = [8, 64], strides = [1, 1]} : vector<8x192xf32> to vector<8x64xf32>
    %28 = arith.mulf %26, %9 : vector<8x64xf32>
    %29 = arith.mulf %25, %24 : vector<8x64xf32>
    %30 = arith.addf %28, %29 : vector<8x64xf32>
    %31 = math.tanh %30 : vector<8x64xf32>
    %32 = arith.mulf %27, %31 : vector<8x64xf32>
    %c1_i32 = arith.constant 1 : i32
    %c8_i32_14 = arith.constant 8 : i32
    %33 = arith.muli %c1_i32, %c8_i32_14 : i32
    %34 = tpu.assume_multiple %33, 8 : i32
    %35 = arith.index_cast %34 : i32 to index
    %c0_15 = arith.constant 0 : index
    %36 = vector.load %arg14[%35, %c0_15] : memref<64x256xf32, #tpu.memory_space<vmem>>, vector<8x256xf32>
    %37 = arith.truncf %32 : vector<8x64xf32> to vector<8x64xbf16>
    %cst_16 = arith.constant dense<0.000000e+00> : vector<8x256xf32>
    %38 = tpu.matmul %37, %7, %cst_16 {dimension_numbers = #tpu.dot_dimension_numbers<[1], [0], [0], [1], [0, 0, 1, 1], [], []>} : vector<8x64xbf16>, vector<64x256xbf16>, vector<8x256xf32> -> vector<8x256xf32>
    %39 = arith.addf %36, %38 : vector<8x256xf32>
    %40 = vector.extract_strided_slice %39 {offsets = [0, 0], sizes = [8, 192], strides = [1, 1]} : vector<8x256xf32> to vector<8x192xf32>
    %41 = arith.negf %40 : vector<8x192xf32>
    %42 = math.exp %41 : vector<8x192xf32>
    %cst_17 = arith.constant 1.000000e+00 : f32
    %43 = vector.broadcast %cst_17 : f32 to vector<8x192xf32>
    %44 = arith.addf %43, %42 : vector<8x192xf32>
    %45 = arith.divf %43, %44 : vector<8x192xf32>
    %46 = vector.extract_strided_slice %39 {offsets = [0, 192], sizes = [8, 64], strides = [1, 1]} : vector<8x256xf32> to vector<8x64xf32>
    %47 = math.tanh %46 : vector<8x64xf32>
    %48 = vector.extract_strided_slice %45 {offsets = [0, 0], sizes = [8, 64], strides = [1, 1]} : vector<8x192xf32> to vector<8x64xf32>
    %49 = vector.extract_strided_slice %45 {offsets = [0, 64], sizes = [8, 64], strides = [1, 1]} : vector<8x192xf32> to vector<8x64xf32>
    %50 = vector.extract_strided_slice %45 {offsets = [0, 128], sizes = [8, 64], strides = [1, 1]} : vector<8x192xf32> to vector<8x64xf32>
    %51 = arith.mulf %49, %30 : vector<8x64xf32>
    %52 = arith.mulf %48, %47 : vector<8x64xf32>
    %53 = arith.addf %51, %52 : vector<8x64xf32>
    %54 = math.tanh %53 : vector<8x64xf32>
    %55 = arith.mulf %50, %54 : vector<8x64xf32>
    %c2_i32 = arith.constant 2 : i32
    %c8_i32_18 = arith.constant 8 : i32
    %56 = arith.muli %c2_i32, %c8_i32_18 : i32
    %57 = tpu.assume_multiple %56, 8 : i32
    %58 = arith.index_cast %57 : i32 to index
    %c0_19 = arith.constant 0 : index
    %59 = vector.load %arg14[%58, %c0_19] : memref<64x256xf32, #tpu.memory_space<vmem>>, vector<8x256xf32>
    %60 = arith.truncf %55 : vector<8x64xf32> to vector<8x64xbf16>
    %cst_20 = arith.constant dense<0.000000e+00> : vector<8x256xf32>
    %61 = tpu.matmul %60, %7, %cst_20 {dimension_numbers = #tpu.dot_dimension_numbers<[1], [0], [0], [1], [0, 0, 1, 1], [], []>} : vector<8x64xbf16>, vector<64x256xbf16>, vector<8x256xf32> -> vector<8x256xf32>
    %62 = arith.addf %59, %61 : vector<8x256xf32>
    %63 = vector.extract_strided_slice %62 {offsets = [0, 0], sizes = [8, 192], strides = [1, 1]} : vector<8x256xf32> to vector<8x192xf32>
    %64 = arith.negf %63 : vector<8x192xf32>
    %65 = math.exp %64 : vector<8x192xf32>
    %cst_21 = arith.constant 1.000000e+00 : f32
    %66 = vector.broadcast %cst_21 : f32 to vector<8x192xf32>
    %67 = arith.addf %66, %65 : vector<8x192xf32>
    %68 = arith.divf %66, %67 : vector<8x192xf32>
    %69 = vector.extract_strided_slice %62 {offsets = [0, 192], sizes = [8, 64], strides = [1, 1]} : vector<8x256xf32> to vector<8x64xf32>
    %70 = math.tanh %69 : vector<8x64xf32>
    %71 = vector.extract_strided_slice %68 {offsets = [0, 0], sizes = [8, 64], strides = [1, 1]} : vector<8x192xf32> to vector<8x64xf32>
    %72 = vector.extract_strided_slice %68 {offsets = [0, 64], sizes = [8, 64], strides = [1, 1]} : vector<8x192xf32> to vector<8x64xf32>
    %73 = vector.extract_strided_slice %68 {offsets = [0, 128], sizes = [8, 64], strides = [1, 1]} : vector<8x192xf32> to vector<8x64xf32>
    %74 = arith.mulf %72, %53 : vector<8x64xf32>
    %75 = arith.mulf %71, %70 : vector<8x64xf32>
    %76 = arith.addf %74, %75 : vector<8x64xf32>
    %77 = math.tanh %76 : vector<8x64xf32>
    %78 = arith.mulf %73, %77 : vector<8x64xf32>
    %c3_i32 = arith.constant 3 : i32
    %c8_i32_22 = arith.constant 8 : i32
    %79 = arith.muli %c3_i32, %c8_i32_22 : i32
    %80 = tpu.assume_multiple %79, 8 : i32
    %81 = arith.index_cast %80 : i32 to index
    %c0_23 = arith.constant 0 : index
    %82 = vector.load %arg14[%81, %c0_23] : memref<64x256xf32, #tpu.memory_space<vmem>>, vector<8x256xf32>
    %83 = arith.truncf %78 : vector<8x64xf32> to vector<8x64xbf16>
    %cst_24 = arith.constant dense<0.000000e+00> : vector<8x256xf32>
    %84 = tpu.matmul %83, %7, %cst_24 {dimension_numbers = #tpu.dot_dimension_numbers<[1], [0], [0], [1], [0, 0, 1, 1], [], []>} : vector<8x64xbf16>, vector<64x256xbf16>, vector<8x256xf32> -> vector<8x256xf32>
    %85 = arith.addf %82, %84 : vector<8x256xf32>
    %86 = vector.extract_strided_slice %85 {offsets = [0, 0], sizes = [8, 192], strides = [1, 1]} : vector<8x256xf32> to vector<8x192xf32>
    %87 = arith.negf %86 : vector<8x192xf32>
    %88 = math.exp %87 : vector<8x192xf32>
    %cst_25 = arith.constant 1.000000e+00 : f32
    %89 = vector.broadcast %cst_25 : f32 to vector<8x192xf32>
    %90 = arith.addf %89, %88 : vector<8x192xf32>
    %91 = arith.divf %89, %90 : vector<8x192xf32>
    %92 = vector.extract_strided_slice %85 {offsets = [0, 192], sizes = [8, 64], strides = [1, 1]} : vector<8x256xf32> to vector<8x64xf32>
    %93 = math.tanh %92 : vector<8x64xf32>
    %94 = vector.extract_strided_slice %91 {offsets = [0, 0], sizes = [8, 64], strides = [1, 1]} : vector<8x192xf32> to vector<8x64xf32>
    %95 = vector.extract_strided_slice %91 {offsets = [0, 64], sizes = [8, 64], strides = [1, 1]} : vector<8x192xf32> to vector<8x64xf32>
    %96 = vector.extract_strided_slice %91 {offsets = [0, 128], sizes = [8, 64], strides = [1, 1]} : vector<8x192xf32> to vector<8x64xf32>
    %97 = arith.mulf %95, %76 : vector<8x64xf32>
    %98 = arith.mulf %94, %93 : vector<8x64xf32>
    %99 = arith.addf %97, %98 : vector<8x64xf32>
    %100 = math.tanh %99 : vector<8x64xf32>
    %101 = arith.mulf %96, %100 : vector<8x64xf32>
    %c4_i32 = arith.constant 4 : i32
    %c8_i32_26 = arith.constant 8 : i32
    %102 = arith.muli %c4_i32, %c8_i32_26 : i32
    %103 = tpu.assume_multiple %102, 8 : i32
    %104 = arith.index_cast %103 : i32 to index
    %c0_27 = arith.constant 0 : index
    %105 = vector.load %arg14[%104, %c0_27] : memref<64x256xf32, #tpu.memory_space<vmem>>, vector<8x256xf32>
    %106 = arith.truncf %101 : vector<8x64xf32> to vector<8x64xbf16>
    %cst_28 = arith.constant dense<0.000000e+00> : vector<8x256xf32>
    %107 = tpu.matmul %106, %7, %cst_28 {dimension_numbers = #tpu.dot_dimension_numbers<[1], [0], [0], [1], [0, 0, 1, 1], [], []>} : vector<8x64xbf16>, vector<64x256xbf16>, vector<8x256xf32> -> vector<8x256xf32>
    %108 = arith.addf %105, %107 : vector<8x256xf32>
    %109 = vector.extract_strided_slice %108 {offsets = [0, 0], sizes = [8, 192], strides = [1, 1]} : vector<8x256xf32> to vector<8x192xf32>
    %110 = arith.negf %109 : vector<8x192xf32>
    %111 = math.exp %110 : vector<8x192xf32>
    %cst_29 = arith.constant 1.000000e+00 : f32
    %112 = vector.broadcast %cst_29 : f32 to vector<8x192xf32>
    %113 = arith.addf %112, %111 : vector<8x192xf32>
    %114 = arith.divf %112, %113 : vector<8x192xf32>
    %115 = vector.extract_strided_slice %108 {offsets = [0, 192], sizes = [8, 64], strides = [1, 1]} : vector<8x256xf32> to vector<8x64xf32>
    %116 = math.tanh %115 : vector<8x64xf32>
    %117 = vector.extract_strided_slice %114 {offsets = [0, 0], sizes = [8, 64], strides = [1, 1]} : vector<8x192xf32> to vector<8x64xf32>
    %118 = vector.extract_strided_slice %114 {offsets = [0, 64], sizes = [8, 64], strides = [1, 1]} : vector<8x192xf32> to vector<8x64xf32>
    %119 = vector.extract_strided_slice %114 {offsets = [0, 128], sizes = [8, 64], strides = [1, 1]} : vector<8x192xf32> to vector<8x64xf32>
    %120 = arith.mulf %118, %99 : vector<8x64xf32>
    %121 = arith.mulf %117, %116 : vector<8x64xf32>
    %122 = arith.addf %120, %121 : vector<8x64xf32>
    %123 = math.tanh %122 : vector<8x64xf32>
    %124 = arith.mulf %119, %123 : vector<8x64xf32>
    %c5_i32 = arith.constant 5 : i32
    %c8_i32_30 = arith.constant 8 : i32
    %125 = arith.muli %c5_i32, %c8_i32_30 : i32
    %126 = tpu.assume_multiple %125, 8 : i32
    %127 = arith.index_cast %126 : i32 to index
    %c0_31 = arith.constant 0 : index
    %128 = vector.load %arg14[%127, %c0_31] : memref<64x256xf32, #tpu.memory_space<vmem>>, vector<8x256xf32>
    %129 = arith.truncf %124 : vector<8x64xf32> to vector<8x64xbf16>
    %cst_32 = arith.constant dense<0.000000e+00> : vector<8x256xf32>
    %130 = tpu.matmul %129, %7, %cst_32 {dimension_numbers = #tpu.dot_dimension_numbers<[1], [0], [0], [1], [0, 0, 1, 1], [], []>} : vector<8x64xbf16>, vector<64x256xbf16>, vector<8x256xf32> -> vector<8x256xf32>
    %131 = arith.addf %128, %130 : vector<8x256xf32>
    %132 = vector.extract_strided_slice %131 {offsets = [0, 0], sizes = [8, 192], strides = [1, 1]} : vector<8x256xf32> to vector<8x192xf32>
    %133 = arith.negf %132 : vector<8x192xf32>
    %134 = math.exp %133 : vector<8x192xf32>
    %cst_33 = arith.constant 1.000000e+00 : f32
    %135 = vector.broadcast %cst_33 : f32 to vector<8x192xf32>
    %136 = arith.addf %135, %134 : vector<8x192xf32>
    %137 = arith.divf %135, %136 : vector<8x192xf32>
    %138 = vector.extract_strided_slice %131 {offsets = [0, 192], sizes = [8, 64], strides = [1, 1]} : vector<8x256xf32> to vector<8x64xf32>
    %139 = math.tanh %138 : vector<8x64xf32>
    %140 = vector.extract_strided_slice %137 {offsets = [0, 0], sizes = [8, 64], strides = [1, 1]} : vector<8x192xf32> to vector<8x64xf32>
    %141 = vector.extract_strided_slice %137 {offsets = [0, 64], sizes = [8, 64], strides = [1, 1]} : vector<8x192xf32> to vector<8x64xf32>
    %142 = vector.extract_strided_slice %137 {offsets = [0, 128], sizes = [8, 64], strides = [1, 1]} : vector<8x192xf32> to vector<8x64xf32>
    %143 = arith.mulf %141, %122 : vector<8x64xf32>
    %144 = arith.mulf %140, %139 : vector<8x64xf32>
    %145 = arith.addf %143, %144 : vector<8x64xf32>
    %146 = math.tanh %145 : vector<8x64xf32>
    %147 = arith.mulf %142, %146 : vector<8x64xf32>
    %c6_i32 = arith.constant 6 : i32
    %c8_i32_34 = arith.constant 8 : i32
    %148 = arith.muli %c6_i32, %c8_i32_34 : i32
    %149 = tpu.assume_multiple %148, 8 : i32
    %150 = arith.index_cast %149 : i32 to index
    %c0_35 = arith.constant 0 : index
    %151 = vector.load %arg14[%150, %c0_35] : memref<64x256xf32, #tpu.memory_space<vmem>>, vector<8x256xf32>
    %152 = arith.truncf %147 : vector<8x64xf32> to vector<8x64xbf16>
    %cst_36 = arith.constant dense<0.000000e+00> : vector<8x256xf32>
    %153 = tpu.matmul %152, %7, %cst_36 {dimension_numbers = #tpu.dot_dimension_numbers<[1], [0], [0], [1], [0, 0, 1, 1], [], []>} : vector<8x64xbf16>, vector<64x256xbf16>, vector<8x256xf32> -> vector<8x256xf32>
    %154 = arith.addf %151, %153 : vector<8x256xf32>
    %155 = vector.extract_strided_slice %154 {offsets = [0, 0], sizes = [8, 192], strides = [1, 1]} : vector<8x256xf32> to vector<8x192xf32>
    %156 = arith.negf %155 : vector<8x192xf32>
    %157 = math.exp %156 : vector<8x192xf32>
    %cst_37 = arith.constant 1.000000e+00 : f32
    %158 = vector.broadcast %cst_37 : f32 to vector<8x192xf32>
    %159 = arith.addf %158, %157 : vector<8x192xf32>
    %160 = arith.divf %158, %159 : vector<8x192xf32>
    %161 = vector.extract_strided_slice %154 {offsets = [0, 192], sizes = [8, 64], strides = [1, 1]} : vector<8x256xf32> to vector<8x64xf32>
    %162 = math.tanh %161 : vector<8x64xf32>
    %163 = vector.extract_strided_slice %160 {offsets = [0, 0], sizes = [8, 64], strides = [1, 1]} : vector<8x192xf32> to vector<8x64xf32>
    %164 = vector.extract_strided_slice %160 {offsets = [0, 64], sizes = [8, 64], strides = [1, 1]} : vector<8x192xf32> to vector<8x64xf32>
    %165 = vector.extract_strided_slice %160 {offsets = [0, 128], sizes = [8, 64], strides = [1, 1]} : vector<8x192xf32> to vector<8x64xf32>
    %166 = arith.mulf %164, %145 : vector<8x64xf32>
    %167 = arith.mulf %163, %162 : vector<8x64xf32>
    %168 = arith.addf %166, %167 : vector<8x64xf32>
    %169 = math.tanh %168 : vector<8x64xf32>
    %170 = arith.mulf %165, %169 : vector<8x64xf32>
    %c7_i32 = arith.constant 7 : i32
    %c8_i32_38 = arith.constant 8 : i32
    %171 = arith.muli %c7_i32, %c8_i32_38 : i32
    %172 = tpu.assume_multiple %171, 8 : i32
    %173 = arith.index_cast %172 : i32 to index
    %c0_39 = arith.constant 0 : index
    %174 = vector.load %arg14[%173, %c0_39] : memref<64x256xf32, #tpu.memory_space<vmem>>, vector<8x256xf32>
    %175 = arith.truncf %170 : vector<8x64xf32> to vector<8x64xbf16>
    %cst_40 = arith.constant dense<0.000000e+00> : vector<8x256xf32>
    %176 = tpu.matmul %175, %7, %cst_40 {dimension_numbers = #tpu.dot_dimension_numbers<[1], [0], [0], [1], [0, 0, 1, 1], [], []>} : vector<8x64xbf16>, vector<64x256xbf16>, vector<8x256xf32> -> vector<8x256xf32>
    %177 = arith.addf %174, %176 : vector<8x256xf32>
    %178 = vector.extract_strided_slice %177 {offsets = [0, 0], sizes = [8, 192], strides = [1, 1]} : vector<8x256xf32> to vector<8x192xf32>
    %179 = arith.negf %178 : vector<8x192xf32>
    %180 = math.exp %179 : vector<8x192xf32>
    %cst_41 = arith.constant 1.000000e+00 : f32
    %181 = vector.broadcast %cst_41 : f32 to vector<8x192xf32>
    %182 = arith.addf %181, %180 : vector<8x192xf32>
    %183 = arith.divf %181, %182 : vector<8x192xf32>
    %184 = vector.extract_strided_slice %177 {offsets = [0, 192], sizes = [8, 64], strides = [1, 1]} : vector<8x256xf32> to vector<8x64xf32>
    %185 = math.tanh %184 : vector<8x64xf32>
    %186 = vector.extract_strided_slice %183 {offsets = [0, 0], sizes = [8, 64], strides = [1, 1]} : vector<8x192xf32> to vector<8x64xf32>
    %187 = vector.extract_strided_slice %183 {offsets = [0, 64], sizes = [8, 64], strides = [1, 1]} : vector<8x192xf32> to vector<8x64xf32>
    %188 = vector.extract_strided_slice %183 {offsets = [0, 128], sizes = [8, 64], strides = [1, 1]} : vector<8x192xf32> to vector<8x64xf32>
    %189 = arith.mulf %187, %168 : vector<8x64xf32>
    %190 = arith.mulf %186, %185 : vector<8x64xf32>
    %191 = arith.addf %189, %190 : vector<8x64xf32>
    %192 = math.tanh %191 : vector<8x64xf32>
    %193 = arith.mulf %188, %192 : vector<8x64xf32>
    %c8_i32_42 = arith.constant 8 : i32
    %c56 = arith.constant 56 : index
    %c0_43 = arith.constant 0 : index
    %194 = vector.load %arg0[%c56, %c0_43] : memref<64x16xbf16, #tpu.memory_space<vmem>>, vector<8x16xbf16>
    %c0_44 = arith.constant 0 : index
    %c0_45 = arith.constant 0 : index
    %195 = vector.load %arg4[%c0_44, %c0_45] : memref<16x256xbf16, #tpu.memory_space<vmem>>, vector<16x256xbf16>
    %cst_46 = arith.constant dense<0.000000e+00> : vector<8x256xf32>
    %196 = tpu.matmul %194, %195, %cst_46 {dimension_numbers = #tpu.dot_dimension_numbers<[1], [0], [0], [1], [0, 0, 1, 1], [], []>} : vector<8x16xbf16>, vector<16x256xbf16>, vector<8x256xf32> -> vector<8x256xf32>
    %c0_47 = arith.constant 0 : index
    %c0_48 = arith.constant 0 : index
    %197 = vector.load %arg5[%c0_47, %c0_48] : memref<1x256xf32, #tpu.memory_space<vmem>>, vector<1x256xf32>
    %198 = vector.broadcast %197 : vector<1x256xf32> to vector<8x256xf32>
    %199 = arith.addf %196, %198 : vector<8x256xf32>
    %200 = vector.extract_strided_slice %199 {offsets = [0, 0], sizes = [8, 192], strides = [1, 1]} : vector<8x256xf32> to vector<8x192xf32>
    %201 = arith.negf %200 : vector<8x192xf32>
    %202 = math.exp %201 : vector<8x192xf32>
    %cst_49 = arith.constant 1.000000e+00 : f32
    %203 = vector.broadcast %cst_49 : f32 to vector<8x192xf32>
    %204 = arith.addf %203, %202 : vector<8x192xf32>
    %205 = arith.divf %203, %204 : vector<8x192xf32>
    %206 = vector.extract_strided_slice %199 {offsets = [0, 192], sizes = [8, 64], strides = [1, 1]} : vector<8x256xf32> to vector<8x64xf32>
    %207 = math.tanh %206 : vector<8x64xf32>
    %208 = vector.extract_strided_slice %205 {offsets = [0, 0], sizes = [8, 64], strides = [1, 1]} : vector<8x192xf32> to vector<8x64xf32>
    %209 = vector.extract_strided_slice %205 {offsets = [0, 64], sizes = [8, 64], strides = [1, 1]} : vector<8x192xf32> to vector<8x64xf32>
    %210 = vector.extract_strided_slice %205 {offsets = [0, 128], sizes = [8, 64], strides = [1, 1]} : vector<8x192xf32> to vector<8x64xf32>
    %211 = arith.mulf %209, %9 : vector<8x64xf32>
    %212 = arith.mulf %208, %207 : vector<8x64xf32>
    %213 = arith.addf %211, %212 : vector<8x64xf32>
    %214 = math.tanh %213 : vector<8x64xf32>
    %215 = arith.mulf %210, %214 : vector<8x64xf32>
    %c0_50 = arith.constant 0 : index
    %c0_51 = arith.constant 0 : index
    %216 = vector.load %arg6[%c0_50, %c0_51] : memref<64x64xf32, #tpu.memory_space<vmem>>, vector<64x64xf32>
    %cst_52 = arith.constant dense<0.000000e+00> : vector<8x64xf32>
    %217 = tpu.matmul %193, %216, %cst_52 {dimension_numbers = #tpu.dot_dimension_numbers<[1], [0], [0], [1], [0, 0, 1, 1], [], []>} : vector<8x64xf32>, vector<64x64xf32>, vector<8x64xf32> -> vector<8x64xf32>
    %c0_53 = arith.constant 0 : index
    %c0_54 = arith.constant 0 : index
    %218 = vector.load %arg7[%c0_53, %c0_54] : memref<64x64xf32, #tpu.memory_space<vmem>>, vector<64x64xf32>
    %cst_55 = arith.constant dense<0.000000e+00> : vector<8x64xf32>
    %219 = tpu.matmul %215, %218, %cst_55 {dimension_numbers = #tpu.dot_dimension_numbers<[1], [0], [0], [1], [0, 0, 1, 1], [], []>} : vector<8x64xf32>, vector<64x64xf32>, vector<8x64xf32> -> vector<8x64xf32>
    %220 = arith.addf %217, %219 : vector<8x64xf32>
    %c0_56 = arith.constant 0 : index
    %c0_57 = arith.constant 0 : index
    %221 = vector.load %arg8[%c0_56, %c0_57] : memref<1x64xf32, #tpu.memory_space<vmem>>, vector<1x64xf32>
    %222 = vector.broadcast %221 : vector<1x64xf32> to vector<8x64xf32>
    %223 = arith.addf %220, %222 : vector<8x64xf32>
    %cst_58 = arith.constant 0.000000e+00 : f32
    %224 = vector.broadcast %cst_58 : f32 to vector<8x64xf32>
    %225 = arith.maximumf %223, %224 : vector<8x64xf32>
    %c0_59 = arith.constant 0 : index
    %c0_60 = arith.constant 0 : index
    %226 = vector.load %arg9[%c0_59, %c0_60] : memref<64x32xf32, #tpu.memory_space<vmem>>, vector<64x32xf32>
    %cst_61 = arith.constant dense<0.000000e+00> : vector<8x32xf32>
    %227 = tpu.matmul %225, %226, %cst_61 {dimension_numbers = #tpu.dot_dimension_numbers<[1], [0], [0], [1], [0, 0, 1, 1], [], []>} : vector<8x64xf32>, vector<64x32xf32>, vector<8x32xf32> -> vector<8x32xf32>
    %c0_62 = arith.constant 0 : index
    %c0_63 = arith.constant 0 : index
    %228 = vector.load %arg10[%c0_62, %c0_63] : memref<1x32xf32, #tpu.memory_space<vmem>>, vector<1x32xf32>
    %229 = vector.broadcast %228 : vector<1x32xf32> to vector<8x32xf32>
    %230 = arith.addf %227, %229 : vector<8x32xf32>
    %cst_64 = arith.constant 0.000000e+00 : f32
    %231 = vector.broadcast %cst_64 : f32 to vector<8x32xf32>
    %232 = arith.maximumf %230, %231 : vector<8x32xf32>
    %c0_65 = arith.constant 0 : index
    %c0_66 = arith.constant 0 : index
    %233 = vector.load %arg11[%c0_65, %c0_66] : memref<32x10xf32, #tpu.memory_space<vmem>>, vector<32x10xf32>
    %cst_67 = arith.constant dense<0.000000e+00> : vector<8x10xf32>
    %234 = tpu.matmul %232, %233, %cst_67 {dimension_numbers = #tpu.dot_dimension_numbers<[1], [0], [0], [1], [0, 0, 1, 1], [], []>} : vector<8x32xf32>, vector<32x10xf32>, vector<8x10xf32> -> vector<8x10xf32>
    %c0_68 = arith.constant 0 : index
    %c0_69 = arith.constant 0 : index
    %235 = vector.load %arg12[%c0_68, %c0_69] : memref<1x10xf32, #tpu.memory_space<vmem>>, vector<1x10xf32>
    %236 = vector.broadcast %235 : vector<1x10xf32> to vector<8x10xf32>
    %237 = arith.addf %234, %236 : vector<8x10xf32>
    %c0_70 = arith.constant 0 : index
    %c0_71 = arith.constant 0 : index
    %238 = vector.load %arg13[%c0_70, %c0_71] : memref<8x10xf32, #tpu.memory_space<vmem>>, vector<8x10xf32>
    tpu.vector_store %arg13[%c0_70, %c0_71], %237 {strides = array<i32>} : memref<8x10xf32, #tpu.memory_space<vmem>>, vector<8x10xf32>,
    return
  }
}

</mosaic_0001>

<llo_original>
// kernel: tpu_custom_call.1
$region0: #{tpu_custom_call.1}
  #allocation0 [shape = 'u32[]', space=smem, size = 0x4, offset = 0x4, fixed_abs, tag = 'smem constant byte address 0x4 - core index']
  #allocation1 [shape = 'u32[144,128]{1,0:T(1,128)}', space=vmem, size = 0x12000, scoped, tag = 'internal scratch']
  #allocation2 [shape = 'f32[64,256]{1,0:T(8,128)}', space=vmem, size = 0x10000, scoped, tag = 'scratch operand']
  %s0 = inlined_call_operand.vmem [shape: bf16[64,16], index: 0, kind: input, shape index: {}]
  %s1 = inlined_call_operand.hbm [shape: bf16[16,256], index: 1, kind: input, shape index: {}]
  %s2 = inlined_call_operand.vmem [shape: f32[1,256], index: 2, kind: input, shape index: {}]
  %s3 = inlined_call_operand.vmem [shape: bf16[64,256], index: 3, kind: input, shape index: {}]
  %s4 = inlined_call_operand.hbm [shape: bf16[16,256], index: 4, kind: input, shape index: {}]
  %s5 = inlined_call_operand.hbm [shape: f32[1,256], index: 5, kind: input, shape index: {}]
  %s6 = inlined_call_operand.vmem [shape: f32[64,64], index: 6, kind: input, shape index: {}]
  %s7 = inlined_call_operand.vmem [shape: f32[64,64], index: 7, kind: input, shape index: {}]
  %s8 = inlined_call_operand.vmem [shape: f32[1,64], index: 8, kind: input, shape index: {}]
  %s9 = inlined_call_operand.vmem [shape: f32[64,32], index: 9, kind: input, shape index: {}]
  %s10 = inlined_call_operand.vmem [shape: f32[1,32], index: 10, kind: input, shape index: {}]
  %s11 = inlined_call_operand.vmem [shape: f32[32,10], index: 11, kind: input, shape index: {}]
  %s12 = inlined_call_operand.vmem [shape: f32[1,10], index: 12, kind: input, shape index: {}]
  %s13 = inlined_call_operand.hbm [shape: f32[8,10], index: 13, kind: output, shape index: {}]
  %s14 = sld [smem:[#allocation0]]
  $region74: #{tpu_custom_call.1} parent=0
    _
  %s16 = ssub.s32 1, %s14
  %s17 = scalar_select 0, %s16, %s14
  $region1: #{tpu_custom_call.1} parent=0
    #allocation3 [shape = 'u8[8192]{0}', space=vmem, size = 0x2000, scoped, tag = 'input window, operand 1, single buffered']
    #allocation4 [shape = 's32[1]{0}', space=sflag, size = 0x4, scoped, tag = 'scoped memory for tpu_custom_call.1']
    #allocation5 [shape = 's32[1]{0}', space=sflag, size = 0x4, scoped, tag = 'scoped memory for tpu_custom_call.1']
    #allocation6 [shape = 'u8[8192]{0}', space=vmem, size = 0x2000, scoped, tag = 'input window, operand 4, single buffered']
    #allocation7 [shape = 's32[1]{0}', space=sflag, size = 0x4, scoped, tag = 'scoped memory for tpu_custom_call.1']
    #allocation8 [shape = 'u8[1024]{0}', space=vmem, size = 0x400, scoped, tag = 'input window, operand 5, single buffered']
    #allocation9 [shape = 'u8[4096]{0}', space=vmem, size = 0x1000, scoped, tag = 'output window, operand 0, single buffered']
    %18 = vsyncpa [#allocation4], 0
    %19 = vsyncpa [#allocation7], 0
    %20 = vsyncpa [#allocation5], 0
    // Predicated region
    $region2: #{tpu_custom_call.1} parent=1 // pred_check
      _
    $region3: #{tpu_custom_call.1} parent=1 // pred_check_branch
      %22 = sbr.rel (0) target = $region5
    $region4: #{tpu_custom_call.1} parent=1 // pred_region
      _
    $region5: #{tpu_custom_call.1} parent=1 // pred_fallthru
      _
    // Predicated region
    $region6: #{tpu_custom_call.1} parent=1 // pred_check
      _
    $region7: #{tpu_custom_call.1} parent=1 // pred_check_branch
      %24 = sbr.rel (0) target = $region9
    $region8: #{tpu_custom_call.1} parent=1 // pred_region
      %s26 = ssub.s32 256, 256
      %27 = vsyncadd [#allocation4], %s26
      %s28 = sshll.u32 [#allocation3], 4
      %s29 = int_to_ptr.vmem [resolvable:$true] %s28
      %34 = dma.hbm_to_vmem [thread:$0]  %s1, 256, %s29, [#allocation4], 128, 128, 8
    $region9: #{tpu_custom_call.1} parent=1 // pred_fallthru
      _
    // Predicated region
    $region10: #{tpu_custom_call.1} parent=1 // pred_check
      _
    $region11: #{tpu_custom_call.1} parent=1 // pred_check_branch
      %36 = sbr.rel (0) target = $region13
    $region12: #{tpu_custom_call.1} parent=1 // pred_region
      _
    $region13: #{tpu_custom_call.1} parent=1 // pred_fallthru
      _
    // Predicated region
    $region14: #{tpu_custom_call.1} parent=1 // pred_check
      _
    $region15: #{tpu_custom_call.1} parent=1 // pred_check_branch
      %38 = sbr.rel (0) target = $region17
    $region16: #{tpu_custom_call.1} parent=1 // pred_region
      _
    $region17: #{tpu_custom_call.1} parent=1 // pred_fallthru
      _
    // Predicated region
    $region18: #{tpu_custom_call.1} parent=1 // pred_check
      _
    $region19: #{tpu_custom_call.1} parent=1 // pred_check_branch
      %40 = sbr.rel (0) target = $region21
    $region20: #{tpu_custom_call.1} parent=1 // pred_region
      %s42 = ssub.s32 256, 256
      %43 = vsyncadd [#allocation7], %s42
      %s44 = sshll.u32 [#allocation6], 4
      %s45 = int_to_ptr.vmem [resolvable:$true] %s44
      %50 = dma.hbm_to_vmem [thread:$0]  %s4, 256, %s45, [#allocation7], 128, 128, 8
    $region21: #{tpu_custom_call.1} parent=1 // pred_fallthru
      _
    // Predicated region
    $region22: #{tpu_custom_call.1} parent=1 // pred_check
      _
    $region23: #{tpu_custom_call.1} parent=1 // pred_check_branch
      %52 = sbr.rel (0) target = $region25
    $region24: #{tpu_custom_call.1} parent=1 // pred_region
      %s54 = ssub.s32 32, 32
      %55 = vsyncadd [#allocation7], %s54
      %s57 = sshll.u32 [#allocation8], 4
      %s58 = int_to_ptr.vmem [resolvable:$true] %s57
      %60 = dma.hbm_to_vmem [thread:$0]  %s5, 32, %s58, [#allocation7]
    $region25: #{tpu_custom_call.1} parent=1 // pred_fallthru
      _
    // Predicated region
    $region26: #{tpu_custom_call.1} parent=1 // pred_check
      _
    $region27: #{tpu_custom_call.1} parent=1 // pred_check_branch
      %62 = sbr.rel (0) target = $region29
    $region28: #{tpu_custom_call.1} parent=1 // pred_region
      _
    $region29: #{tpu_custom_call.1} parent=1 // pred_fallthru
      _
    // Predicated region
    $region30: #{tpu_custom_call.1} parent=1 // pred_check
      _
    $region31: #{tpu_custom_call.1} parent=1 // pred_check_branch
      %64 = sbr.rel (0) target = $region33
    $region32: #{tpu_custom_call.1} parent=1 // pred_region
      _
    $region33: #{tpu_custom_call.1} parent=1 // pred_fallthru
      _
    // Predicated region
    $region34: #{tpu_custom_call.1} parent=1 // pred_check
      _
    $region35: #{tpu_custom_call.1} parent=1 // pred_check_branch
      %66 = sbr.rel (0) target = $region37
    $region36: #{tpu_custom_call.1} parent=1 // pred_region
      _
    $region37: #{tpu_custom_call.1} parent=1 // pred_fallthru
      _
    // Predicated region
    $region38: #{tpu_custom_call.1} parent=1 // pred_check
      _
    $region39: #{tpu_custom_call.1} parent=1 // pred_check_branch
      %68 = sbr.rel (0) target = $region41
    $region40: #{tpu_custom_call.1} parent=1 // pred_region
      _
    $region41: #{tpu_custom_call.1} parent=1 // pred_fallthru
      _
    // Predicated region
    $region42: #{tpu_custom_call.1} parent=1 // pred_check
      _
    $region43: #{tpu_custom_call.1} parent=1 // pred_check_branch
      %70 = sbr.rel (0) target = $region45
    $region44: #{tpu_custom_call.1} parent=1 // pred_region
      _
    $region45: #{tpu_custom_call.1} parent=1 // pred_fallthru
      _
    // Predicated region
    $region46: #{tpu_custom_call.1} parent=1 // pred_check
      _
    $region47: #{tpu_custom_call.1} parent=1 // pred_check_branch
      %72 = sbr.rel (0) target = $region49
    $region48: #{tpu_custom_call.1} parent=1 // pred_region
      _
    $region49: #{tpu_custom_call.1} parent=1 // pred_fallthru
      _
    // Predicated region
    $region50: #{tpu_custom_call.1} parent=1 // pred_check
      _
    $region51: #{tpu_custom_call.1} parent=1 // pred_check_branch
      %74 = sbr.rel (0) target = $region53
    $region52: #{tpu_custom_call.1} parent=1 // pred_region
      _
    $region53: #{tpu_custom_call.1} parent=1 // pred_fallthru
      _
    // Predicated region
    $region54: #{tpu_custom_call.1} parent=1 // pred_check
      _
    $region55: #{tpu_custom_call.1} parent=1 // pred_check_branch
      %76 = sbr.rel (0) target = $region57
    $region56: #{tpu_custom_call.1} parent=1 // pred_region
      %77 = dma.done [#allocation4], 256
    $region57: #{tpu_custom_call.1} parent=1 // pred_fallthru
      _
    // Predicated region
    $region58: #{tpu_custom_call.1} parent=1 // pred_check
      _
    $region59: #{tpu_custom_call.1} parent=1 // pred_check_branch
      %79 = sbr.rel (0) target = $region61
    $region60: #{tpu_custom_call.1} parent=1 // pred_region
      %80 = dma.done [#allocation7], 256
    $region61: #{tpu_custom_call.1} parent=1 // pred_fallthru
      _
    // Predicated region
    $region62: #{tpu_custom_call.1} parent=1 // pred_check
      _
    $region63: #{tpu_custom_call.1} parent=1 // pred_check_branch
      %82 = sbr.rel (0) target = $region65
    $region64: #{tpu_custom_call.1} parent=1 // pred_region
      %83 = dma.done [#allocation7], 32
    $region65: #{tpu_custom_call.1} parent=1 // pred_fallthru
      _
    %v85 = vld [vmem:[%s0] sm:$0xf]
    %v86 = vld [vmem:[%s0 + $0x4] sm:$0xf]
    %v87 = vld [vmem:[%s0 + $0x8] sm:$0xf]
    %v88 = vld [vmem:[%s0 + $0xc] sm:$0xf]
    %v89 = vld [vmem:[%s0 + $0x10] sm:$0xf]
    %v90 = vld [vmem:[%s0 + $0x14] sm:$0xf]
    %v91 = vld [vmem:[%s0 + $0x18] sm:$0xf]
    %v92 = vld [vmem:[%s0 + $0x1c] sm:$0xf]
    %v93 = vld [vmem:[#allocation3] sm:$0xff]
    %v94 = vld [vmem:[#allocation3 + $0x8] sm:$0xff]
    %v95 = vld [vmem:[%s2] sm:$0x3]
    %v97 = vlaneseq
    %v98 = vshrl.u32 %v97, 7
    %v99 = vsub.s32 0, %v98
    %v100 = vrot.slane %v95, %v99
    %v101 = vlaneseq
    %v102 = vshrl.u32 %v101, 7
    %v103 = vsub.s32 1, %v102
    %v104 = vrot.slane %v95, %v103
    %v115 = vunpack.c.l.b16 %v85
    %v116 = vunpack.c.l.b16 %v86
    %v117 = vunpack.c.l.b16 %v87
    %v118 = vunpack.c.l.b16 %v88
    %v119 = vunpack.c.l.b16 %v89
    %v120 = vunpack.c.l.b16 %v90
    %v121 = vunpack.c.l.b16 %v91
    %v122 = vunpack.c.l.b16 %v92
    %v123 = vpack.c.b16 %v116, %v115
    %v124 = vpack.c.b16 %v118, %v117
    %v125 = vpack.c.b16 %v120, %v119
    %v126 = vpack.c.b16 %v122, %v121
    %v129 = vunpack.c.l.b16 %v93
    %v130 = vunpack.c.h.b16 %v93
    %v131 = vunpack.c.l.b16 %v94
    %v132 = vunpack.c.h.b16 %v94
    %v133 = vpack.c.b16 %v131, %v129
    %v134 = vpack.c.b16 %v132, %v130
    %vm137 = vcmask 130048
    %v139 = vsel %vm137, %v123, 0
    %v142 = vsel %vm137, %v124, 0
    %v145 = vsel %vm137, %v125, 0
    %v148 = vsel %vm137, %v126, 0
    %150 = vmatprep.subr.bf16.mxu0 %v134
    %151 = vmatpush1.bf16.msra.mxu0 %v133
    %152 = vmatprep.subr.bf16.mxu0 0
    %153 = vmatpush1.bf16.msra.mxu0 0
    %154 = vmatprep.subr.bf16.mxu0 0
    %155 = vmatpush1.bf16.msra.mxu0 0
    %156 = vmatprep.subr.bf16.mxu0 0
    %157 = vmatpush1.bf16.msra.mxu0 0
    %158 = vmatprep.subr.bf16.mxu0 0
    %159 = vmatpush1.bf16.msra.mxu0 0
    %160 = vmatprep.subr.bf16.mxu0 0
    %161 = vmatpush1.bf16.msra.mxu0 0
    %162 = vmatprep.subr.bf16.mxu0 0
    %163 = vmatpush1.bf16.msra.mxu0 0
    %164 = vmatprep.subr.bf16.mxu0 0
    %165 = vmatpush1.bf16.msra.mxu0 0
    %166 = vmatprep.subr.bf16.mxu0 0
    %167 = vmatpush1.bf16.msra.mxu0 0
    %168 = vmatprep.subr.bf16.mxu0 0
    %169 = vmatpush1.bf16.msra.mxu0 0
    %170 = vmatprep.subr.bf16.mxu0 0
    %171 = vmatpush1.bf16.msra.mxu0 0
    %172 = vmatprep.subr.bf16.mxu0 0
    %173 = vmatpush1.bf16.msra.mxu0 0
    %174 = vmatprep.subr.bf16.mxu0 0
    %175 = vmatpush1.bf16.msra.mxu0 0
    %176 = vmatprep.subr.bf16.mxu0 0
    %177 = vmatpush1.bf16.msra.mxu0 0
    %178 = vmatprep.subr.bf16.mxu0 0
    %179 = vmatpush1.bf16.msra.mxu0 0
    %180 = vmatprep.subr.bf16.mxu0 0
    %181 = vmatpush1.bf16.msra.mxu0 0
    %182 = vmatprep.mubr.bf16.mxu0 0
    %183 = vmatmul.mubr.bf16.gmra.mrb[0].mxu0 %v139
    %v184 = vpop.f32.mrb[0].mxu0
    %v185 = vadd.f32 %v100, %v184
    %v186 = vpop.f32.mrb[0].mxu0
    %v187 = vadd.f32 %v104, %v186
    %v188 = vpop.f32.mrb[0].mxu0
    %v189 = vadd.f32 %v100, %v188
    %v190 = vpop.f32.mrb[0].mxu0
    %v191 = vadd.f32 %v104, %v190
    %192 = vmatprep.mubr.bf16.mxu0 0
    %193 = vmatmul.mubr.bf16.gmra.mrb[0].mxu0 %v142
    %v194 = vpop.f32.mrb[0].mxu0
    %v195 = vadd.f32 %v100, %v194
    %v196 = vpop.f32.mrb[0].mxu0
    %v197 = vadd.f32 %v104, %v196
    %v198 = vpop.f32.mrb[0].mxu0
    %v199 = vadd.f32 %v100, %v198
    %v200 = vpop.f32.mrb[0].mxu0
    %v201 = vadd.f32 %v104, %v200
    %202 = vmatprep.mubr.bf16.mxu0 0
    %203 = vmatmul.mubr.bf16.gmra.mrb[0].mxu0 %v145
    %v204 = vpop.f32.mrb[0].mxu0
    %v205 = vadd.f32 %v100, %v204
    %v206 = vpop.f32.mrb[0].mxu0
    %v207 = vadd.f32 %v104, %v206
    %v208 = vpop.f32.mrb[0].mxu0
    %v209 = vadd.f32 %v100, %v208
    %v210 = vpop.f32.mrb[0].mxu0
    %v211 = vadd.f32 %v104, %v210
    %212 = vmatprep.mubr.bf16.mxu0 0
    %213 = vmatmul.mubr.bf16.gmra.mrb[0].mxu0 %v148
    %v214 = vpop.f32.mrb[0].mxu0
    %v215 = vadd.f32 %v100, %v214
    %v216 = vpop.f32.mrb[0].mxu0
    %v217 = vadd.f32 %v104, %v216
    %v218 = vpop.f32.mrb[0].mxu0
    %v219 = vadd.f32 %v100, %v218
    %v220 = vpop.f32.mrb[0].mxu0
    %v221 = vadd.f32 %v104, %v220
    %222 = vdwg.mxu0
    %223 = vst [vmem:[#allocation2] sm:$0xff] %v185
    %224 = vst [vmem:[#allocation2 + $0x8] sm:$0xff] %v187
    %225 = vst [vmem:[#allocation2 + $0x10] sm:$0xff] %v189
    %226 = vst [vmem:[#allocation2 + $0x18] sm:$0xff] %v191
    %227 = vst [vmem:[#allocation2 + $0x20] sm:$0xff] %v195
    %228 = vst [vmem:[#allocation2 + $0x28] sm:$0xff] %v197
    %229 = vst [vmem:[#allocation2 + $0x30] sm:$0xff] %v199
    %230 = vst [vmem:[#allocation2 + $0x38] sm:$0xff] %v201
    %231 = vst [vmem:[#allocation2 + $0x40] sm:$0xff] %v205
    %232 = vst [vmem:[#allocation2 + $0x48] sm:$0xff] %v207
    %233 = vst [vmem:[#allocation2 + $0x50] sm:$0xff] %v209
    %234 = vst [vmem:[#allocation2 + $0x58] sm:$0xff] %v211
    %235 = vst [vmem:[#allocation2 + $0x60] sm:$0xff] %v215
    %236 = vst [vmem:[#allocation2 + $0x68] sm:$0xff] %v217
    %237 = vst [vmem:[#allocation2 + $0x70] sm:$0xff] %v219
    %238 = vst [vmem:[#allocation2 + $0x78] sm:$0xff] %v221
    %v239 = vld [vmem:[%s3] sm:$0xff]
    %v240 = vld [vmem:[%s3 + $0x8] sm:$0xff]
    %v241 = vld [vmem:[%s3 + $0x10] sm:$0xff]
    %v242 = vld [vmem:[%s3 + $0x18] sm:$0xff]
    %v243 = vld [vmem:[%s3 + $0x20] sm:$0xff]
    %v244 = vld [vmem:[%s3 + $0x28] sm:$0xff]
    %v245 = vld [vmem:[%s3 + $0x30] sm:$0xff]
    %v246 = vld [vmem:[%s3 + $0x38] sm:$0xff]
    %s247 = smul.u32 0, 2
    %s248 = smul.addr %s247, 8
    %s249 = scalar_lea.vmem [#allocation2], %s248
    %v250 = vld [vmem:[%s249] sm:$0xff]
    %v251 = vld [vmem:[%s249 + $0x8] sm:$0xff]
    %v260 = vunpack.c.l.b16 %v239
    %v261 = vunpack.c.h.b16 %v239
    %v262 = vunpack.c.l.b16 %v240
    %v263 = vunpack.c.h.b16 %v240
    %v264 = vunpack.c.l.b16 %v241
    %v265 = vunpack.c.h.b16 %v241
    %v266 = vunpack.c.l.b16 %v242
    %v267 = vunpack.c.h.b16 %v242
    %v268 = vunpack.c.l.b16 %v243
    %v269 = vunpack.c.h.b16 %v243
    %v270 = vunpack.c.l.b16 %v244
    %v271 = vunpack.c.h.b16 %v244
    %v272 = vunpack.c.l.b16 %v245
    %v273 = vunpack.c.h.b16 %v245
    %v274 = vunpack.c.l.b16 %v246
    %v275 = vunpack.c.h.b16 %v246
    %v276 = vpack.c.b16 %v262, %v260
    %v277 = vpack.c.b16 %v263, %v261
    %v278 = vpack.c.b16 %v266, %v264
    %v279 = vpack.c.b16 %v267, %v265
    %v280 = vpack.c.b16 %v270, %v268
    %v281 = vpack.c.b16 %v271, %v269
    %v282 = vpack.c.b16 %v274, %v272
    %v283 = vpack.c.b16 %v275, %v273
    %vm292 = vcmask 523264
    %v294 = vsel %vm292, 0, 0
    %296 = vmatprep.subr.bf16.mxu0 %v277
    %297 = vmatpush1.bf16.msra.mxu0 %v276
    %298 = vmatprep.subr.bf16.mxu0 %v279
    %299 = vmatpush1.bf16.msra.mxu0 %v278
    %300 = vmatprep.subr.bf16.mxu0 %v281
    %301 = vmatpush1.bf16.msra.mxu0 %v280
    %302 = vmatprep.subr.bf16.mxu0 %v283
    %303 = vmatpush1.bf16.msra.mxu0 %v282
    %304 = vmatprep.subr.bf16.mxu0 0
    %305 = vmatpush1.bf16.msra.mxu0 0
    %306 = vmatprep.subr.bf16.mxu0 0
    %307 = vmatpush1.bf16.msra.mxu0 0
    %308 = vmatprep.subr.bf16.mxu0 0
    %309 = vmatpush1.bf16.msra.mxu0 0
    %310 = vmatprep.subr.bf16.mxu0 0
    %311 = vmatpush1.bf16.msra.mxu0 0
    %312 = vmatprep.subr.bf16.mxu0 0
    %313 = vmatpush1.bf16.msra.mxu0 0
    %314 = vmatprep.subr.bf16.mxu0 0
    %315 = vmatpush1.bf16.msra.mxu0 0
    %316 = vmatprep.subr.bf16.mxu0 0
    %317 = vmatpush1.bf16.msra.mxu0 0
    %318 = vmatprep.subr.bf16.mxu0 0
    %319 = vmatpush1.bf16.msra.mxu0 0
    %320 = vmatprep.subr.bf16.mxu0 0
    %321 = vmatpush1.bf16.msra.mxu0 0
    %322 = vmatprep.subr.bf16.mxu0 0
    %323 = vmatpush1.bf16.msra.mxu0 0
    %324 = vmatprep.subr.bf16.mxu0 0
    %325 = vmatpush1.bf16.msra.mxu0 0
    %326 = vmatprep.subr.bf16.mxu0 0
    %327 = vmatpush1.bf16.msra.mxu0 0
    %328 = vmatprep.mubr.bf16.mxu0 0
    %329 = vmatmul.mubr.bf16.gmra.mrb[0].mxu0 %v294
    %v330 = vpop.f32.mrb[0].mxu0
    %v331 = vadd.f32 0.0, %v330
    %v332 = vpop.f32.mrb[0].mxu0
    %v333 = vadd.f32 0.0, %v332
    %v334 = vpop.f32.mrb[0].mxu0
    %v335 = vpop.f32.mrb[0].mxu0
    %336 = vdwg.mxu0
    %v337 = vadd.f32 %v250, %v331
    %v338 = vadd.f32 %v251, %v333
    %v339 = vxor.u32 %v337, 2147483648
    %v340 = vxor.u32 %v338, 2147483648
    %v341 = vmul.f32 %v339, 1.442695
    %v342 = vpow.pop %v341
    %v343 = vmul.f32 %v340, 1.442695
    %v344 = vpow.pop %v343
    %v345 = vadd.f32 %v342, 1.0
    %v346 = vadd.f32 %v344, 1.0
    %v347 = vrcp.pop %v345
    %v348 = vmul.f32 1.0, %v347
    %v349 = vrcp.pop %v346
    %v350 = vmul.f32 1.0, %v349
    %v351 = vtanh.pop %v338
    %v352 = vmul.f32 %v348, 0.0
    %354 = vrot.lane.b32.xlu0 %v351, 64
    %v355 = vpop.permute.xlu0 %354
    %v357 = vmul.f32 %v348, %v355
    %359 = vrot.lane.b32.xlu0 %v357, 64
    %v360 = vpop.permute.xlu0 %359
    %v362 = vadd.f32 %v352, %v360
    %v363 = vtanh.pop %v362
    %365 = vrot.lane.b32.xlu0 %v363, 64
    %v366 = vpop.permute.xlu0 %365
    %v368 = vmul.f32 %v350, %v366
    %s369 = smul.u32 1, 2
    %s370 = smul.addr %s369, 8
    %s371 = scalar_lea.vmem [#allocation2], %s370
    %v372 = vld [vmem:[%s371] sm:$0xff]
    %v373 = vld [vmem:[%s371 + $0x8] sm:$0xff]
    %v374 = vpack.c.bf16 %v368, %v368
    %v376 = vsel %vm292, %v374, 0
    %378 = vmatprep.subr.bf16.mxu0 %v277
    %379 = vmatpush1.bf16.msra.mxu0 %v276
    %380 = vmatprep.subr.bf16.mxu0 %v279
    %381 = vmatpush1.bf16.msra.mxu0 %v278
    %382 = vmatprep.subr.bf16.mxu0 %v281
    %383 = vmatpush1.bf16.msra.mxu0 %v280
    %384 = vmatprep.subr.bf16.mxu0 %v283
    %385 = vmatpush1.bf16.msra.mxu0 %v282
    %386 = vmatprep.subr.bf16.mxu0 0
    %387 = vmatpush1.bf16.msra.mxu0 0
    %388 = vmatprep.subr.bf16.mxu0 0
    %389 = vmatpush1.bf16.msra.mxu0 0
    %390 = vmatprep.subr.bf16.mxu0 0
    %391 = vmatpush1.bf16.msra.mxu0 0
    %392 = vmatprep.subr.bf16.mxu0 0
    %393 = vmatpush1.bf16.msra.mxu0 0
    %394 = vmatprep.subr.bf16.mxu0 0
    %395 = vmatpush1.bf16.msra.mxu0 0
    %396 = vmatprep.subr.bf16.mxu0 0
    %397 = vmatpush1.bf16.msra.mxu0 0
    %398 = vmatprep.subr.bf16.mxu0 0
    %399 = vmatpush1.bf16.msra.mxu0 0
    %400 = vmatprep.subr.bf16.mxu0 0
    %401 = vmatpush1.bf16.msra.mxu0 0
    %402 = vmatprep.subr.bf16.mxu0 0
    %403 = vmatpush1.bf16.msra.mxu0 0
    %404 = vmatprep.subr.bf16.mxu0 0
    %405 = vmatpush1.bf16.msra.mxu0 0
    %406 = vmatprep.subr.bf16.mxu0 0
    %407 = vmatpush1.bf16.msra.mxu0 0
    %408 = vmatprep.subr.bf16.mxu0 0
    %409 = vmatpush1.bf16.msra.mxu0 0
    %410 = vmatprep.mubr.bf16.mxu0 0
    %411 = vmatmul.mubr.bf16.gmra.mrb[0].mxu0 %v376
    %v412 = vpop.f32.mrb[0].mxu0
    %v413 = vadd.f32 0.0, %v412
    %v414 = vpop.f32.mrb[0].mxu0
    %v415 = vadd.f32 0.0, %v414
    %v416 = vpop.f32.mrb[0].mxu0
    %v417 = vpop.f32.mrb[0].mxu0
    %418 = vdwg.mxu0
    %v419 = vadd.f32 %v372, %v413
    %v420 = vadd.f32 %v373, %v415
    %v421 = vxor.u32 %v419, 2147483648
    %v422 = vxor.u32 %v420, 2147483648
    %v423 = vmul.f32 %v421, 1.442695
    %v424 = vpow.pop %v423
    %v425 = vmul.f32 %v422, 1.442695
    %v426 = vpow.pop %v425
    %v427 = vadd.f32 %v424, 1.0
    %v428 = vadd.f32 %v426, 1.0
    %v429 = vrcp.pop %v427
    %v430 = vmul.f32 1.0, %v429
    %v431 = vrcp.pop %v428
    %v432 = vmul.f32 1.0, %v431
    %v433 = vtanh.pop %v420
    %v434 = vmul.f32 %v430, %v362
    %436 = vrot.lane.b32.xlu0 %v433, 64
    %v437 = vpop.permute.xlu0 %436
    %v439 = vmul.f32 %v430, %v437
    %441 = vrot.lane.b32.xlu0 %v439, 64
    %v442 = vpop.permute.xlu0 %441
    %v444 = vadd.f32 %v434, %v442
    %v445 = vtanh.pop %v444
    %447 = vrot.lane.b32.xlu0 %v445, 64
    %v448 = vpop.permute.xlu0 %447
    %v450 = vmul.f32 %v432, %v448
    %s451 = smul.u32 2, 2
    %s452 = smul.addr %s451, 8
    %s453 = scalar_lea.vmem [#allocation2], %s452
    %v454 = vld [vmem:[%s453] sm:$0xff]
    %v455 = vld [vmem:[%s453 + $0x8] sm:$0xff]
    %v456 = vpack.c.bf16 %v450, %v450
    %v458 = vsel %vm292, %v456, 0
    %460 = vmatprep.subr.bf16.mxu0 %v277
    %461 = vmatpush1.bf16.msra.mxu0 %v276
    %462 = vmatprep.subr.bf16.mxu0 %v279
    %463 = vmatpush1.bf16.msra.mxu0 %v278
    %464 = vmatprep.subr.bf16.mxu0 %v281
    %465 = vmatpush1.bf16.msra.mxu0 %v280
    %466 = vmatprep.subr.bf16.mxu0 %v283
    %467 = vmatpush1.bf16.msra.mxu0 %v282
    %468 = vmatprep.subr.bf16.mxu0 0
    %469 = vmatpush1.bf16.msra.mxu0 0
    %470 = vmatprep.subr.bf16.mxu0 0
    %471 = vmatpush1.bf16.msra.mxu0 0
    %472 = vmatprep.subr.bf16.mxu0 0
    %473 = vmatpush1.bf16.msra.mxu0 0
    %474 = vmatprep.subr.bf16.mxu0 0
    %475 = vmatpush1.bf16.msra.mxu0 0
    %476 = vmatprep.subr.bf16.mxu0 0
    %477 = vmatpush1.bf16.msra.mxu0 0
    %478 = vmatprep.subr.bf16.mxu0 0
    %479 = vmatpush1.bf16.msra.mxu0 0
    %480 = vmatprep.subr.bf16.mxu0 0
    %481 = vmatpush1.bf16.msra.mxu0 0
    %482 = vmatprep.subr.bf16.mxu0 0
    %483 = vmatpush1.bf16.msra.mxu0 0
    %484 = vmatprep.subr.bf16.mxu0 0
    %485 = vmatpush1.bf16.msra.mxu0 0
    %486 = vmatprep.subr.bf16.mxu0 0
    %487 = vmatpush1.bf16.msra.mxu0 0
    %488 = vmatprep.subr.bf16.mxu0 0
    %489 = vmatpush1.bf16.msra.mxu0 0
    %490 = vmatprep.subr.bf16.mxu0 0
    %491 = vmatpush1.bf16.msra.mxu0 0
    %492 = vmatprep.mubr.bf16.mxu0 0
    %493 = vmatmul.mubr.bf16.gmra.mrb[0].mxu0 %v458
    %v494 = vpop.f32.mrb[0].mxu0
    %v495 = vadd.f32 0.0, %v494
    %v496 = vpop.f32.mrb[0].mxu0
    %v497 = vadd.f32 0.0, %v496
    %v498 = vpop.f32.mrb[0].mxu0
    %v499 = vpop.f32.mrb[0].mxu0
    %500 = vdwg.mxu0
    %v501 = vadd.f32 %v454, %v495
    %v502 = vadd.f32 %v455, %v497
    %v503 = vxor.u32 %v501, 2147483648
    %v504 = vxor.u32 %v502, 2147483648
    %v505 = vmul.f32 %v503, 1.442695
    %v506 = vpow.pop %v505
    %v507 = vmul.f32 %v504, 1.442695
    %v508 = vpow.pop %v507
    %v509 = vadd.f32 %v506, 1.0
    %v510 = vadd.f32 %v508, 1.0
    %v511 = vrcp.pop %v509
    %v512 = vmul.f32 1.0, %v511
    %v513 = vrcp.pop %v510
    %v514 = vmul.f32 1.0, %v513
    %v515 = vtanh.pop %v502
    %v516 = vmul.f32 %v512, %v444
    %518 = vrot.lane.b32.xlu0 %v515, 64
    %v519 = vpop.permute.xlu0 %518
    %v521 = vmul.f32 %v512, %v519
    %523 = vrot.lane.b32.xlu0 %v521, 64
    %v524 = vpop.permute.xlu0 %523
    %v526 = vadd.f32 %v516, %v524
    %v527 = vtanh.pop %v526
    %529 = vrot.lane.b32.xlu0 %v527, 64
    %v530 = vpop.permute.xlu0 %529
    %v532 = vmul.f32 %v514, %v530
    %s533 = smul.u32 3, 2
    %s534 = smul.addr %s533, 8
    %s535 = scalar_lea.vmem [#allocation2], %s534
    %v536 = vld [vmem:[%s535] sm:$0xff]
    %v537 = vld [vmem:[%s535 + $0x8] sm:$0xff]
    %v538 = vpack.c.bf16 %v532, %v532
    %v540 = vsel %vm292, %v538, 0
    %542 = vmatprep.subr.bf16.mxu0 %v277
    %543 = vmatpush1.bf16.msra.mxu0 %v276
    %544 = vmatprep.subr.bf16.mxu0 %v279
    %545 = vmatpush1.bf16.msra.mxu0 %v278
    %546 = vmatprep.subr.bf16.mxu0 %v281
    %547 = vmatpush1.bf16.msra.mxu0 %v280
    %548 = vmatprep.subr.bf16.mxu0 %v283
    %549 = vmatpush1.bf16.msra.mxu0 %v282
    %550 = vmatprep.subr.bf16.mxu0 0
    %551 = vmatpush1.bf16.msra.mxu0 0
    %552 = vmatprep.subr.bf16.mxu0 0
    %553 = vmatpush1.bf16.msra.mxu0 0
    %554 = vmatprep.subr.bf16.mxu0 0
    %555 = vmatpush1.bf16.msra.mxu0 0
    %556 = vmatprep.subr.bf16.mxu0 0
    %557 = vmatpush1.bf16.msra.mxu0 0
    %558 = vmatprep.subr.bf16.mxu0 0
    %559 = vmatpush1.bf16.msra.mxu0 0
    %560 = vmatprep.subr.bf16.mxu0 0
    %561 = vmatpush1.bf16.msra.mxu0 0
    %562 = vmatprep.subr.bf16.mxu0 0
    %563 = vmatpush1.bf16.msra.mxu0 0
    %564 = vmatprep.subr.bf16.mxu0 0
    %565 = vmatpush1.bf16.msra.mxu0 0
    %566 = vmatprep.subr.bf16.mxu0 0
    %567 = vmatpush1.bf16.msra.mxu0 0
    %568 = vmatprep.subr.bf16.mxu0 0
    %569 = vmatpush1.bf16.msra.mxu0 0
    %570 = vmatprep.subr.bf16.mxu0 0
    %571 = vmatpush1.bf16.msra.mxu0 0
    %572 = vmatprep.subr.bf16.mxu0 0
    %573 = vmatpush1.bf16.msra.mxu0 0
    %574 = vmatprep.mubr.bf16.mxu0 0
    %575 = vmatmul.mubr.bf16.gmra.mrb[0].mxu0 %v540
    %v576 = vpop.f32.mrb[0].mxu0
    %v577 = vadd.f32 0.0, %v576
    %v578 = vpop.f32.mrb[0].mxu0
    %v579 = vadd.f32 0.0, %v578
    %v580 = vpop.f32.mrb[0].mxu0
    %v581 = vpop.f32.mrb[0].mxu0
    %582 = vdwg.mxu0
    %v583 = vadd.f32 %v536, %v577
    %v584 = vadd.f32 %v537, %v579
    %v585 = vxor.u32 %v583, 2147483648
    %v586 = vxor.u32 %v584, 2147483648
    %v587 = vmul.f32 %v585, 1.442695
    %v588 = vpow.pop %v587
    %v589 = vmul.f32 %v586, 1.442695
    %v590 = vpow.pop %v589
    %v591 = vadd.f32 %v588, 1.0
    %v592 = vadd.f32 %v590, 1.0
    %v593 = vrcp.pop %v591
    %v594 = vmul.f32 1.0, %v593
    %v595 = vrcp.pop %v592
    %v596 = vmul.f32 1.0, %v595
    %v597 = vtanh.pop %v584
    %v598 = vmul.f32 %v594, %v526
    %600 = vrot.lane.b32.xlu0 %v597, 64
    %v601 = vpop.permute.xlu0 %600
    %v603 = vmul.f32 %v594, %v601
    %605 = vrot.lane.b32.xlu0 %v603, 64
    %v606 = vpop.permute.xlu0 %605
    %v608 = vadd.f32 %v598, %v606
    %v609 = vtanh.pop %v608
    %611 = vrot.lane.b32.xlu0 %v609, 64
    %v612 = vpop.permute.xlu0 %611
    %v614 = vmul.f32 %v596, %v612
    %s615 = smul.u32 4, 2
    %s616 = smul.addr %s615, 8
    %s617 = scalar_lea.vmem [#allocation2], %s616
    %v618 = vld [vmem:[%s617] sm:$0xff]
    %v619 = vld [vmem:[%s617 + $0x8] sm:$0xff]
    %v620 = vpack.c.bf16 %v614, %v614
    %v622 = vsel %vm292, %v620, 0
    %624 = vmatprep.subr.bf16.mxu0 %v277
    %625 = vmatpush1.bf16.msra.mxu0 %v276
    %626 = vmatprep.subr.bf16.mxu0 %v279
    %627 = vmatpush1.bf16.msra.mxu0 %v278
    %628 = vmatprep.subr.bf16.mxu0 %v281
    %629 = vmatpush1.bf16.msra.mxu0 %v280
    %630 = vmatprep.subr.bf16.mxu0 %v283
    %631 = vmatpush1.bf16.msra.mxu0 %v282
    %632 = vmatprep.subr.bf16.mxu0 0
    %633 = vmatpush1.bf16.msra.mxu0 0
    %634 = vmatprep.subr.bf16.mxu0 0
    %635 = vmatpush1.bf16.msra.mxu0 0
    %636 = vmatprep.subr.bf16.mxu0 0
    %637 = vmatpush1.bf16.msra.mxu0 0
    %638 = vmatprep.subr.bf16.mxu0 0
    %639 = vmatpush1.bf16.msra.mxu0 0
    %640 = vmatprep.subr.bf16.mxu0 0
    %641 = vmatpush1.bf16.msra.mxu0 0
    %642 = vmatprep.subr.bf16.mxu0 0
    %643 = vmatpush1.bf16.msra.mxu0 0
    %644 = vmatprep.subr.bf16.mxu0 0
    %645 = vmatpush1.bf16.msra.mxu0 0
    %646 = vmatprep.subr.bf16.mxu0 0
    %647 = vmatpush1.bf16.msra.mxu0 0
    %648 = vmatprep.subr.bf16.mxu0 0
    %649 = vmatpush1.bf16.msra.mxu0 0
    %650 = vmatprep.subr.bf16.mxu0 0
    %651 = vmatpush1.bf16.msra.mxu0 0
    %652 = vmatprep.subr.bf16.mxu0 0
    %653 = vmatpush1.bf16.msra.mxu0 0
    %654 = vmatprep.subr.bf16.mxu0 0
    %655 = vmatpush1.bf16.msra.mxu0 0
    %656 = vmatprep.mubr.bf16.mxu0 0
    %657 = vmatmul.mubr.bf16.gmra.mrb[0].mxu0 %v622
    %v658 = vpop.f32.mrb[0].mxu0
    %v659 = vadd.f32 0.0, %v658
    %v660 = vpop.f32.mrb[0].mxu0
    %v661 = vadd.f32 0.0, %v660
    %v662 = vpop.f32.mrb[0].mxu0
    %v663 = vpop.f32.mrb[0].mxu0
    %664 = vdwg.mxu0
    %v665 = vadd.f32 %v618, %v659
    %v666 = vadd.f32 %v619, %v661
    %v667 = vxor.u32 %v665, 2147483648
    %v668 = vxor.u32 %v666, 2147483648
    %v669 = vmul.f32 %v667, 1.442695
    %v670 = vpow.pop %v669
    %v671 = vmul.f32 %v668, 1.442695
    %v672 = vpow.pop %v671
    %v673 = vadd.f32 %v670, 1.0
    %v674 = vadd.f32 %v672, 1.0
    %v675 = vrcp.pop %v673
    %v676 = vmul.f32 1.0, %v675
    %v677 = vrcp.pop %v674
    %v678 = vmul.f32 1.0, %v677
    %v679 = vtanh.pop %v666
    %v680 = vmul.f32 %v676, %v608
    %682 = vrot.lane.b32.xlu0 %v679, 64
    %v683 = vpop.permute.xlu0 %682
    %v685 = vmul.f32 %v676, %v683
    %687 = vrot.lane.b32.xlu0 %v685, 64
    %v688 = vpop.permute.xlu0 %687
    %v690 = vadd.f32 %v680, %v688
    %v691 = vtanh.pop %v690
    %693 = vrot.lane.b32.xlu0 %v691, 64
    %v694 = vpop.permute.xlu0 %693
    %v696 = vmul.f32 %v678, %v694
    %s697 = smul.u32 5, 2
    %s698 = smul.addr %s697, 8
    %s699 = scalar_lea.vmem [#allocation2], %s698
    %v700 = vld [vmem:[%s699] sm:$0xff]
    %v701 = vld [vmem:[%s699 + $0x8] sm:$0xff]
    %v702 = vpack.c.bf16 %v696, %v696
    %v704 = vsel %vm292, %v702, 0
    %706 = vmatprep.subr.bf16.mxu0 %v277
    %707 = vmatpush1.bf16.msra.mxu0 %v276
    %708 = vmatprep.subr.bf16.mxu0 %v279
    %709 = vmatpush1.bf16.msra.mxu0 %v278
    %710 = vmatprep.subr.bf16.mxu0 %v281
    %711 = vmatpush1.bf16.msra.mxu0 %v280
    %712 = vmatprep.subr.bf16.mxu0 %v283
    %713 = vmatpush1.bf16.msra.mxu0 %v282
    %714 = vmatprep.subr.bf16.mxu0 0
    %715 = vmatpush1.bf16.msra.mxu0 0
    %716 = vmatprep.subr.bf16.mxu0 0
    %717 = vmatpush1.bf16.msra.mxu0 0
    %718 = vmatprep.subr.bf16.mxu0 0
    %719 = vmatpush1.bf16.msra.mxu0 0
    %720 = vmatprep.subr.bf16.mxu0 0
    %721 = vmatpush1.bf16.msra.mxu0 0
    %722 = vmatprep.subr.bf16.mxu0 0
    %723 = vmatpush1.bf16.msra.mxu0 0
    %724 = vmatprep.subr.bf16.mxu0 0
    %725 = vmatpush1.bf16.msra.mxu0 0
    %726 = vmatprep.subr.bf16.mxu0 0
    %727 = vmatpush1.bf16.msra.mxu0 0
    %728 = vmatprep.subr.bf16.mxu0 0
    %729 = vmatpush1.bf16.msra.mxu0 0
    %730 = vmatprep.subr.bf16.mxu0 0
    %731 = vmatpush1.bf16.msra.mxu0 0
    %732 = vmatprep.subr.bf16.mxu0 0
    %733 = vmatpush1.bf16.msra.mxu0 0
    %734 = vmatprep.subr.bf16.mxu0 0
    %735 = vmatpush1.bf16.msra.mxu0 0
    %736 = vmatprep.subr.bf16.mxu0 0
    %737 = vmatpush1.bf16.msra.mxu0 0
    %738 = vmatprep.mubr.bf16.mxu0 0
    %739 = vmatmul.mubr.bf16.gmra.mrb[0].mxu0 %v704
    %v740 = vpop.f32.mrb[0].mxu0
    %v741 = vadd.f32 0.0, %v740
    %v742 = vpop.f32.mrb[0].mxu0
    %v743 = vadd.f32 0.0, %v742
    %v744 = vpop.f32.mrb[0].mxu0
    %v745 = vpop.f32.mrb[0].mxu0
    %746 = vdwg.mxu0
    %v747 = vadd.f32 %v700, %v741
    %v748 = vadd.f32 %v701, %v743
    %v749 = vxor.u32 %v747, 2147483648
    %v750 = vxor.u32 %v748, 2147483648
    %v751 = vmul.f32 %v749, 1.442695
    %v752 = vpow.pop %v751
    %v753 = vmul.f32 %v750, 1.442695
    %v754 = vpow.pop %v753
    %v755 = vadd.f32 %v752, 1.0
    %v756 = vadd.f32 %v754, 1.0
    %v757 = vrcp.pop %v755
    %v758 = vmul.f32 1.0, %v757
    %v759 = vrcp.pop %v756
    %v760 = vmul.f32 1.0, %v759
    %v761 = vtanh.pop %v748
    %v762 = vmul.f32 %v758, %v690
    %764 = vrot.lane.b32.xlu0 %v761, 64
    %v765 = vpop.permute.xlu0 %764
    %v767 = vmul.f32 %v758, %v765
    %769 = vrot.lane.b32.xlu0 %v767, 64
    %v770 = vpop.permute.xlu0 %769
    %v772 = vadd.f32 %v762, %v770
    %v773 = vtanh.pop %v772
    %775 = vrot.lane.b32.xlu0 %v773, 64
    %v776 = vpop.permute.xlu0 %775
    %v778 = vmul.f32 %v760, %v776
    %s779 = smul.u32 6, 2
    %s780 = smul.addr %s779, 8
    %s781 = scalar_lea.vmem [#allocation2], %s780
    %v782 = vld [vmem:[%s781] sm:$0xff]
    %v783 = vld [vmem:[%s781 + $0x8] sm:$0xff]
    %v784 = vpack.c.bf16 %v778, %v778
    %v786 = vsel %vm292, %v784, 0
    %788 = vmatprep.subr.bf16.mxu0 %v277
    %789 = vmatpush1.bf16.msra.mxu0 %v276
    %790 = vmatprep.subr.bf16.mxu0 %v279
    %791 = vmatpush1.bf16.msra.mxu0 %v278
    %792 = vmatprep.subr.bf16.mxu0 %v281
    %793 = vmatpush1.bf16.msra.mxu0 %v280
    %794 = vmatprep.subr.bf16.mxu0 %v283
    %795 = vmatpush1.bf16.msra.mxu0 %v282
    %796 = vmatprep.subr.bf16.mxu0 0
    %797 = vmatpush1.bf16.msra.mxu0 0
    %798 = vmatprep.subr.bf16.mxu0 0
    %799 = vmatpush1.bf16.msra.mxu0 0
    %800 = vmatprep.subr.bf16.mxu0 0
    %801 = vmatpush1.bf16.msra.mxu0 0
    %802 = vmatprep.subr.bf16.mxu0 0
    %803 = vmatpush1.bf16.msra.mxu0 0
    %804 = vmatprep.subr.bf16.mxu0 0
    %805 = vmatpush1.bf16.msra.mxu0 0
    %806 = vmatprep.subr.bf16.mxu0 0
    %807 = vmatpush1.bf16.msra.mxu0 0
    %808 = vmatprep.subr.bf16.mxu0 0
    %809 = vmatpush1.bf16.msra.mxu0 0
    %810 = vmatprep.subr.bf16.mxu0 0
    %811 = vmatpush1.bf16.msra.mxu0 0
    %812 = vmatprep.subr.bf16.mxu0 0
    %813 = vmatpush1.bf16.msra.mxu0 0
    %814 = vmatprep.subr.bf16.mxu0 0
    %815 = vmatpush1.bf16.msra.mxu0 0
    %816 = vmatprep.subr.bf16.mxu0 0
    %817 = vmatpush1.bf16.msra.mxu0 0
    %818 = vmatprep.subr.bf16.mxu0 0
    %819 = vmatpush1.bf16.msra.mxu0 0
    %820 = vmatprep.mubr.bf16.mxu0 0
    %821 = vmatmul.mubr.bf16.gmra.mrb[0].mxu0 %v786
    %v822 = vpop.f32.mrb[0].mxu0
    %v823 = vadd.f32 0.0, %v822
    %v824 = vpop.f32.mrb[0].mxu0
    %v825 = vadd.f32 0.0, %v824
    %v826 = vpop.f32.mrb[0].mxu0
    %v827 = vpop.f32.mrb[0].mxu0
    %828 = vdwg.mxu0
    %v829 = vadd.f32 %v782, %v823
    %v830 = vadd.f32 %v783, %v825
    %v831 = vxor.u32 %v829, 2147483648
    %v832 = vxor.u32 %v830, 2147483648
    %v833 = vmul.f32 %v831, 1.442695
    %v834 = vpow.pop %v833
    %v835 = vmul.f32 %v832, 1.442695
    %v836 = vpow.pop %v835
    %v837 = vadd.f32 %v834, 1.0
    %v838 = vadd.f32 %v836, 1.0
    %v839 = vrcp.pop %v837
    %v840 = vmul.f32 1.0, %v839
    %v841 = vrcp.pop %v838
    %v842 = vmul.f32 1.0, %v841
    %v843 = vtanh.pop %v830
    %v844 = vmul.f32 %v840, %v772
    %846 = vrot.lane.b32.xlu0 %v843, 64
    %v847 = vpop.permute.xlu0 %846
    %v849 = vmul.f32 %v840, %v847
    %851 = vrot.lane.b32.xlu0 %v849, 64
    %v852 = vpop.permute.xlu0 %851
    %v854 = vadd.f32 %v844, %v852
    %v855 = vtanh.pop %v854
    %857 = vrot.lane.b32.xlu0 %v855, 64
    %v858 = vpop.permute.xlu0 %857
    %v860 = vmul.f32 %v842, %v858
    %s861 = smul.u32 7, 2
    %s862 = smul.addr %s861, 8
    %s863 = scalar_lea.vmem [#allocation2], %s862
    %v864 = vld [vmem:[%s863] sm:$0xff]
    %v865 = vld [vmem:[%s863 + $0x8] sm:$0xff]
    %v866 = vpack.c.bf16 %v860, %v860
    %v868 = vsel %vm292, %v866, 0
    %870 = vmatprep.subr.bf16.mxu0 %v277
    %871 = vmatpush1.bf16.msra.mxu0 %v276
    %872 = vmatprep.subr.bf16.mxu0 %v279
    %873 = vmatpush1.bf16.msra.mxu0 %v278
    %874 = vmatprep.subr.bf16.mxu0 %v281
    %875 = vmatpush1.bf16.msra.mxu0 %v280
    %876 = vmatprep.subr.bf16.mxu0 %v283
    %877 = vmatpush1.bf16.msra.mxu0 %v282
    %878 = vmatprep.subr.bf16.mxu0 0
    %879 = vmatpush1.bf16.msra.mxu0 0
    %880 = vmatprep.subr.bf16.mxu0 0
    %881 = vmatpush1.bf16.msra.mxu0 0
    %882 = vmatprep.subr.bf16.mxu0 0
    %883 = vmatpush1.bf16.msra.mxu0 0
    %884 = vmatprep.subr.bf16.mxu0 0
    %885 = vmatpush1.bf16.msra.mxu0 0
    %886 = vmatprep.subr.bf16.mxu0 0
    %887 = vmatpush1.bf16.msra.mxu0 0
    %888 = vmatprep.subr.bf16.mxu0 0
    %889 = vmatpush1.bf16.msra.mxu0 0
    %890 = vmatprep.subr.bf16.mxu0 0
    %891 = vmatpush1.bf16.msra.mxu0 0
    %892 = vmatprep.subr.bf16.mxu0 0
    %893 = vmatpush1.bf16.msra.mxu0 0
    %894 = vmatprep.subr.bf16.mxu0 0
    %895 = vmatpush1.bf16.msra.mxu0 0
    %896 = vmatprep.subr.bf16.mxu0 0
    %897 = vmatpush1.bf16.msra.mxu0 0
    %898 = vmatprep.subr.bf16.mxu0 0
    %899 = vmatpush1.bf16.msra.mxu0 0
    %900 = vmatprep.subr.bf16.mxu0 0
    %901 = vmatpush1.bf16.msra.mxu0 0
    %902 = vmatprep.mubr.bf16.mxu0 0
    %903 = vmatmul.mubr.bf16.gmra.mrb[0].mxu0 %v868
    %v904 = vpop.f32.mrb[0].mxu0
    %v905 = vadd.f32 0.0, %v904
    %v906 = vpop.f32.mrb[0].mxu0
    %v907 = vadd.f32 0.0, %v906
    %v908 = vpop.f32.mrb[0].mxu0
    %v909 = vpop.f32.mrb[0].mxu0
    %910 = vdwg.mxu0
    %v911 = vadd.f32 %v864, %v905
    %v912 = vadd.f32 %v865, %v907
    %v913 = vxor.u32 %v911, 2147483648
    %v914 = vxor.u32 %v912, 2147483648
    %v915 = vmul.f32 %v913, 1.442695
    %v916 = vpow.pop %v915
    %v917 = vmul.f32 %v914, 1.442695
    %v918 = vpow.pop %v917
    %v919 = vadd.f32 %v916, 1.0
    %v920 = vadd.f32 %v918, 1.0
    %v921 = vrcp.pop %v919
    %v922 = vmul.f32 1.0, %v921
    %v923 = vrcp.pop %v920
    %v924 = vmul.f32 1.0, %v923
    %v925 = vtanh.pop %v912
    %v926 = vmul.f32 %v922, %v854
    %928 = vrot.lane.b32.xlu0 %v925, 64
    %v929 = vpop.permute.xlu0 %928
    %v931 = vmul.f32 %v922, %v929
    %933 = vrot.lane.b32.xlu0 %v931, 64
    %v934 = vpop.permute.xlu0 %933
    %v936 = vadd.f32 %v926, %v934
    %v937 = vtanh.pop %v936
    %939 = vrot.lane.b32.xlu0 %v937, 64
    %v940 = vpop.permute.xlu0 %939
    %v942 = vmul.f32 %v924, %v940
    %v943 = vld [vmem:[%s0 + $0x1c] sm:$0xf]
    %v944 = vld [vmem:[#allocation6] sm:$0xff]
    %v945 = vld [vmem:[#allocation6 + $0x8] sm:$0xff]
    %v946 = vld [vmem:[#allocation8] sm:$0x3]
    %v948 = vlaneseq
    %v949 = vshrl.u32 %v948, 7
    %v950 = vsub.s32 0, %v949
    %v951 = vrot.slane %v946, %v950
    %v952 = vlaneseq
    %v953 = vshrl.u32 %v952, 7
    %v954 = vsub.s32 1, %v953
    %v955 = vrot.slane %v946, %v954
    %v960 = vunpack.c.l.b16 %v944
    %v961 = vunpack.c.h.b16 %v944
    %v962 = vunpack.c.l.b16 %v945
    %v963 = vunpack.c.h.b16 %v945
    %v964 = vpack.c.b16 %v962, %v960
    %v965 = vpack.c.b16 %v963, %v961
    %v969 = vsel %vm137, %v943, 0
    %971 = vmatprep.subr.bf16.mxu0 %v965
    %972 = vmatpush1.bf16.msra.mxu0 %v964
    %973 = vmatprep.subr.bf16.mxu0 0
    %974 = vmatpush1.bf16.msra.mxu0 0
    %975 = vmatprep.subr.bf16.mxu0 0
    %976 = vmatpush1.bf16.msra.mxu0 0
    %977 = vmatprep.subr.bf16.mxu0 0
    %978 = vmatpush1.bf16.msra.mxu0 0
    %979 = vmatprep.subr.bf16.mxu0 0
    %980 = vmatpush1.bf16.msra.mxu0 0
    %981 = vmatprep.subr.bf16.mxu0 0
    %982 = vmatpush1.bf16.msra.mxu0 0
    %983 = vmatprep.subr.bf16.mxu0 0
    %984 = vmatpush1.bf16.msra.mxu0 0
    %985 = vmatprep.subr.bf16.mxu0 0
    %986 = vmatpush1.bf16.msra.mxu0 0
    %987 = vmatprep.subr.bf16.mxu0 0
    %988 = vmatpush1.bf16.msra.mxu0 0
    %989 = vmatprep.subr.bf16.mxu0 0
    %990 = vmatpush1.bf16.msra.mxu0 0
    %991 = vmatprep.subr.bf16.mxu0 0
    %992 = vmatpush1.bf16.msra.mxu0 0
    %993 = vmatprep.subr.bf16.mxu0 0
    %994 = vmatpush1.bf16.msra.mxu0 0
    %995 = vmatprep.subr.bf16.mxu0 0
    %996 = vmatpush1.bf16.msra.mxu0 0
    %997 = vmatprep.subr.bf16.mxu0 0
    %998 = vmatpush1.bf16.msra.mxu0 0
    %999 = vmatprep.subr.bf16.mxu0 0
    %1000 = vmatpush1.bf16.msra.mxu0 0
    %1001 = vmatprep.subr.bf16.mxu0 0
    %1002 = vmatpush1.bf16.msra.mxu0 0
    %1003 = vmatprep.mubr.bf16.mxu0 0
    %1004 = vmatmul.mubr.bf16.gmra.mrb[0].mxu0 %v969
    %v1005 = vpop.f32.mrb[0].mxu0
    %v1006 = vadd.f32 %v951, %v1005
    %v1007 = vpop.f32.mrb[0].mxu0
    %v1008 = vadd.f32 %v955, %v1007
    %v1009 = vpop.f32.mrb[0].mxu0
    %v1010 = vpop.f32.mrb[0].mxu0
    %1011 = vdwg.mxu0
    %v1012 = vxor.u32 %v1006, 2147483648
    %v1013 = vxor.u32 %v1008, 2147483648
    %v1014 = vmul.f32 %v1012, 1.442695
    %v1015 = vpow.pop %v1014
    %v1016 = vmul.f32 %v1013, 1.442695
    %v1017 = vpow.pop %v1016
    %v1018 = vadd.f32 %v1015, 1.0
    %v1019 = vadd.f32 %v1017, 1.0
    %v1020 = vrcp.pop %v1018
    %v1021 = vmul.f32 1.0, %v1020
    %v1022 = vrcp.pop %v1019
    %v1023 = vmul.f32 1.0, %v1022
    %v1024 = vtanh.pop %v1008
    %v1025 = vmul.f32 %v1021, 0.0
    %1027 = vrot.lane.b32.xlu0 %v1024, 64
    %v1028 = vpop.permute.xlu0 %1027
    %v1030 = vmul.f32 %v1021, %v1028
    %1032 = vrot.lane.b32.xlu0 %v1030, 64
    %v1033 = vpop.permute.xlu0 %1032
    %v1035 = vadd.f32 %v1025, %v1033
    %v1036 = vtanh.pop %v1035
    %1038 = vrot.lane.b32.xlu0 %v1036, 64
    %v1039 = vpop.permute.xlu0 %1038
    %v1041 = vmul.f32 %v1023, %v1039
    %v1042 = vld [vmem:[%s6] sm:$0xff]
    %v1043 = vld [vmem:[%s6 + $0x8] sm:$0xff]
    %v1044 = vld [vmem:[%s6 + $0x10] sm:$0xff]
    %v1045 = vld [vmem:[%s6 + $0x18] sm:$0xff]
    %v1046 = vld [vmem:[%s6 + $0x20] sm:$0xff]
    %v1047 = vld [vmem:[%s6 + $0x28] sm:$0xff]
    %v1048 = vld [vmem:[%s6 + $0x30] sm:$0xff]
    %v1049 = vld [vmem:[%s6 + $0x38] sm:$0xff]
    %v1050 = vld [vmem:[%s7] sm:$0xff]
    %v1051 = vld [vmem:[%s7 + $0x8] sm:$0xff]
    %v1052 = vld [vmem:[%s7 + $0x10] sm:$0xff]
    %v1053 = vld [vmem:[%s7 + $0x18] sm:$0xff]
    %v1054 = vld [vmem:[%s7 + $0x20] sm:$0xff]
    %v1055 = vld [vmem:[%s7 + $0x28] sm:$0xff]
    %v1056 = vld [vmem:[%s7 + $0x30] sm:$0xff]
    %v1057 = vld [vmem:[%s7 + $0x38] sm:$0xff]
    %v1059 = vsel %vm292, %v1041, 0
    %1061 = vmatprep.subr.mxu0 0.0
    %1062 = vmatpush1.msra.mxu0 %v1050
    %1063 = vmatprep.subr.mxu0 0.0
    %1064 = vmatpush1.msra.mxu0 %v1051
    %1065 = vmatprep.subr.mxu0 0.0
    %1066 = vmatpush1.msra.mxu0 %v1052
    %1067 = vmatprep.subr.mxu0 0.0
    %1068 = vmatpush1.msra.mxu0 %v1053
    %1069 = vmatprep.subr.mxu0 0.0
    %1070 = vmatpush1.msra.mxu0 %v1054
    %1071 = vmatprep.subr.mxu0 0.0
    %1072 = vmatpush1.msra.mxu0 %v1055
    %1073 = vmatprep.subr.mxu0 0.0
    %1074 = vmatpush1.msra.mxu0 %v1056
    %1075 = vmatprep.subr.mxu0 0.0
    %1076 = vmatpush1.msra.mxu0 %v1057
    %1077 = vmatprep.subr.mxu0 0.0
    %1078 = vmatpush1.msra.mxu0 0.0
    %1079 = vmatprep.subr.mxu0 0.0
    %1080 = vmatpush1.msra.mxu0 0.0
    %1081 = vmatprep.subr.mxu0 0.0
    %1082 = vmatpush1.msra.mxu0 0.0
    %1083 = vmatprep.subr.mxu0 0.0
    %1084 = vmatpush1.msra.mxu0 0.0
    %1085 = vmatprep.subr.mxu0 0.0
    %1086 = vmatpush1.msra.mxu0 0.0
    %1087 = vmatprep.subr.mxu0 0.0
    %1088 = vmatpush1.msra.mxu0 0.0
    %1089 = vmatprep.subr.mxu0 0.0
    %1090 = vmatpush1.msra.mxu0 0.0
    %1091 = vmatprep.subr.mxu0 0.0
    %1092 = vmatpush1.msra.mxu0 0.0
    %1093 = vmatprep.subr.mxu0 0.0
    %1094 = vmatpush1.msra.mxu0 0.0
    %1095 = vmatprep.subr.mxu0 0.0
    %1096 = vmatpush1.msra.mxu0 0.0
    %1097 = vmatprep.subr.mxu0 0.0
    %1098 = vmatpush1.msra.mxu0 0.0
    %1099 = vmatprep.subr.mxu0 0.0
    %1100 = vmatpush1.msra.mxu0 0.0
    %1101 = vmatprep.subr.mxu0 0.0
    %1102 = vmatpush1.msra.mxu0 0.0
    %1103 = vmatprep.subr.mxu0 0.0
    %1104 = vmatpush1.msra.mxu0 0.0
    %1105 = vmatprep.subr.mxu0 0.0
    %1106 = vmatpush1.msra.mxu0 0.0
    %1107 = vmatprep.subr.mxu0 0.0
    %1108 = vmatpush1.msra.mxu0 0.0
    %1109 = vmatprep.subr.mxu0 0.0
    %1110 = vmatpush1.msra.mxu0 0.0
    %1111 = vmatprep.subr.mxu0 0.0
    %1112 = vmatpush1.msra.mxu0 0.0
    %1113 = vmatprep.subr.mxu0 0.0
    %1114 = vmatpush1.msra.mxu0 0.0
    %1115 = vmatprep.subr.mxu0 0.0
    %1116 = vmatpush1.msra.mxu0 0.0
    %1117 = vmatprep.subr.mxu0 0.0
    %1118 = vmatpush1.msra.mxu0 0.0
    %1119 = vmatprep.subr.mxu0 0.0
    %1120 = vmatpush1.msra.mxu0 0.0
    %1121 = vmatprep.subr.mxu0 0.0
    %1122 = vmatpush1.msra.mxu0 0.0
    %1123 = vmatprep.subr.mxu0 0.0
    %1124 = vmatpush1.msra.mxu0 0.0
    %1125 = vmatprep.mubr.f32.mxu0 0.0
    %1126 = vmatmul.mubr.f32.gmra.mrb[0].mxu0 %v1059
    %v1127 = vpop.f32.mrb[0].mxu0
    %v1128 = vadd.f32 0.0, %v1127
    %v1129 = vpop.f32.mrb[0].mxu0
    %1130 = vdwg.mxu0
    %v1132 = vsel %vm292, %v942, 0
    %1134 = vmatprep.subr.mxu0 0.0
    %1135 = vmatpush1.msra.mxu0 %v1042
    %1136 = vmatprep.subr.mxu0 0.0
    %1137 = vmatpush1.msra.mxu0 %v1043
    %1138 = vmatprep.subr.mxu0 0.0
    %1139 = vmatpush1.msra.mxu0 %v1044
    %1140 = vmatprep.subr.mxu0 0.0
    %1141 = vmatpush1.msra.mxu0 %v1045
    %1142 = vmatprep.subr.mxu0 0.0
    %1143 = vmatpush1.msra.mxu0 %v1046
    %1144 = vmatprep.subr.mxu0 0.0
    %1145 = vmatpush1.msra.mxu0 %v1047
    %1146 = vmatprep.subr.mxu0 0.0
    %1147 = vmatpush1.msra.mxu0 %v1048
    %1148 = vmatprep.subr.mxu0 0.0
    %1149 = vmatpush1.msra.mxu0 %v1049
    %1150 = vmatprep.subr.mxu0 0.0
    %1151 = vmatpush1.msra.mxu0 0.0
    %1152 = vmatprep.subr.mxu0 0.0
    %1153 = vmatpush1.msra.mxu0 0.0
    %1154 = vmatprep.subr.mxu0 0.0
    %1155 = vmatpush1.msra.mxu0 0.0
    %1156 = vmatprep.subr.mxu0 0.0
    %1157 = vmatpush1.msra.mxu0 0.0
    %1158 = vmatprep.subr.mxu0 0.0
    %1159 = vmatpush1.msra.mxu0 0.0
    %1160 = vmatprep.subr.mxu0 0.0
    %1161 = vmatpush1.msra.mxu0 0.0
    %1162 = vmatprep.subr.mxu0 0.0
    %1163 = vmatpush1.msra.mxu0 0.0
    %1164 = vmatprep.subr.mxu0 0.0
    %1165 = vmatpush1.msra.mxu0 0.0
    %1166 = vmatprep.subr.mxu0 0.0
    %1167 = vmatpush1.msra.mxu0 0.0
    %1168 = vmatprep.subr.mxu0 0.0
    %1169 = vmatpush1.msra.mxu0 0.0
    %1170 = vmatprep.subr.mxu0 0.0
    %1171 = vmatpush1.msra.mxu0 0.0
    %1172 = vmatprep.subr.mxu0 0.0
    %1173 = vmatpush1.msra.mxu0 0.0
    %1174 = vmatprep.subr.mxu0 0.0
    %1175 = vmatpush1.msra.mxu0 0.0
    %1176 = vmatprep.subr.mxu0 0.0
    %1177 = vmatpush1.msra.mxu0 0.0
    %1178 = vmatprep.subr.mxu0 0.0
    %1179 = vmatpush1.msra.mxu0 0.0
    %1180 = vmatprep.subr.mxu0 0.0
    %1181 = vmatpush1.msra.mxu0 0.0
    %1182 = vmatprep.subr.mxu0 0.0
    %1183 = vmatpush1.msra.mxu0 0.0
    %1184 = vmatprep.subr.mxu0 0.0
    %1185 = vmatpush1.msra.mxu0 0.0
    %1186 = vmatprep.subr.mxu0 0.0
    %1187 = vmatpush1.msra.mxu0 0.0
    %1188 = vmatprep.subr.mxu0 0.0
    %1189 = vmatpush1.msra.mxu0 0.0
    %1190 = vmatprep.subr.mxu0 0.0
    %1191 = vmatpush1.msra.mxu0 0.0
    %1192 = vmatprep.subr.mxu0 0.0
    %1193 = vmatpush1.msra.mxu0 0.0
    %1194 = vmatprep.subr.mxu0 0.0
    %1195 = vmatpush1.msra.mxu0 0.0
    %1196 = vmatprep.subr.mxu0 0.0
    %1197 = vmatpush1.msra.mxu0 0.0
    %1198 = vmatprep.mubr.f32.mxu0 0.0
    %1199 = vmatmul.mubr.f32.gmra.mrb[0].mxu0 %v1132
    %v1200 = vpop.f32.mrb[0].mxu0
    %v1201 = vadd.f32 %v1128, %v1200
    %v1202 = vpop.f32.mrb[0].mxu0
    %1203 = vdwg.mxu0
    %v1204 = vld [vmem:[%s8] sm:$0x1]
    %v1206 = vlaneseq
    %v1207 = vshrl.u32 %v1206, 7
    %v1208 = vsub.s32 0, %v1207
    %v1209 = vrot.slane %v1204, %v1208
    %v1211 = vadd.f32 %v1201, %v1209
    %v1212 = vmax.f32 %v1211, 0.0
    %v1213 = vld [vmem:[%s9] sm:$0xff]
    %v1214 = vld [vmem:[%s9 + $0x8] sm:$0xff]
    %v1215 = vld [vmem:[%s9 + $0x10] sm:$0xff]
    %v1216 = vld [vmem:[%s9 + $0x18] sm:$0xff]
    %v1217 = vld [vmem:[%s9 + $0x20] sm:$0xff]
    %v1218 = vld [vmem:[%s9 + $0x28] sm:$0xff]
    %v1219 = vld [vmem:[%s9 + $0x30] sm:$0xff]
    %v1220 = vld [vmem:[%s9 + $0x38] sm:$0xff]
    %v1221 = vld [vmem:[%s10] sm:$0x1]
    %v1223 = vlaneseq
    %v1224 = vshrl.u32 %v1223, 7
    %v1225 = vsub.s32 0, %v1224
    %v1226 = vrot.slane %v1221, %v1225
    %v1229 = vsel %vm292, %v1212, 0
    %1231 = vmatprep.subr.mxu0 0.0
    %1232 = vmatpush1.msra.mxu0 %v1213
    %1233 = vmatprep.subr.mxu0 0.0
    %1234 = vmatpush1.msra.mxu0 %v1214
    %1235 = vmatprep.subr.mxu0 0.0
    %1236 = vmatpush1.msra.mxu0 %v1215
    %1237 = vmatprep.subr.mxu0 0.0
    %1238 = vmatpush1.msra.mxu0 %v1216
    %1239 = vmatprep.subr.mxu0 0.0
    %1240 = vmatpush1.msra.mxu0 %v1217
    %1241 = vmatprep.subr.mxu0 0.0
    %1242 = vmatpush1.msra.mxu0 %v1218
    %1243 = vmatprep.subr.mxu0 0.0
    %1244 = vmatpush1.msra.mxu0 %v1219
    %1245 = vmatprep.subr.mxu0 0.0
    %1246 = vmatpush1.msra.mxu0 %v1220
    %1247 = vmatprep.subr.mxu0 0.0
    %1248 = vmatpush1.msra.mxu0 0.0
    %1249 = vmatprep.subr.mxu0 0.0
    %1250 = vmatpush1.msra.mxu0 0.0
    %1251 = vmatprep.subr.mxu0 0.0
    %1252 = vmatpush1.msra.mxu0 0.0
    %1253 = vmatprep.subr.mxu0 0.0
    %1254 = vmatpush1.msra.mxu0 0.0
    %1255 = vmatprep.subr.mxu0 0.0
    %1256 = vmatpush1.msra.mxu0 0.0
    %1257 = vmatprep.subr.mxu0 0.0
    %1258 = vmatpush1.msra.mxu0 0.0
    %1259 = vmatprep.subr.mxu0 0.0
    %1260 = vmatpush1.msra.mxu0 0.0
    %1261 = vmatprep.subr.mxu0 0.0
    %1262 = vmatpush1.msra.mxu0 0.0
    %1263 = vmatprep.subr.mxu0 0.0
    %1264 = vmatpush1.msra.mxu0 0.0
    %1265 = vmatprep.subr.mxu0 0.0
    %1266 = vmatpush1.msra.mxu0 0.0
    %1267 = vmatprep.subr.mxu0 0.0
    %1268 = vmatpush1.msra.mxu0 0.0
    %1269 = vmatprep.subr.mxu0 0.0
    %1270 = vmatpush1.msra.mxu0 0.0
    %1271 = vmatprep.subr.mxu0 0.0
    %1272 = vmatpush1.msra.mxu0 0.0
    %1273 = vmatprep.subr.mxu0 0.0
    %1274 = vmatpush1.msra.mxu0 0.0
    %1275 = vmatprep.subr.mxu0 0.0
    %1276 = vmatpush1.msra.mxu0 0.0
    %1277 = vmatprep.subr.mxu0 0.0
    %1278 = vmatpush1.msra.mxu0 0.0
    %1279 = vmatprep.subr.mxu0 0.0
    %1280 = vmatpush1.msra.mxu0 0.0
    %1281 = vmatprep.subr.mxu0 0.0
    %1282 = vmatpush1.msra.mxu0 0.0
    %1283 = vmatprep.subr.mxu0 0.0
    %1284 = vmatpush1.msra.mxu0 0.0
    %1285 = vmatprep.subr.mxu0 0.0
    %1286 = vmatpush1.msra.mxu0 0.0
    %1287 = vmatprep.subr.mxu0 0.0
    %1288 = vmatpush1.msra.mxu0 0.0
    %1289 = vmatprep.subr.mxu0 0.0
    %1290 = vmatpush1.msra.mxu0 0.0
    %1291 = vmatprep.subr.mxu0 0.0
    %1292 = vmatpush1.msra.mxu0 0.0
    %1293 = vmatprep.subr.mxu0 0.0
    %1294 = vmatpush1.msra.mxu0 0.0
    %1295 = vmatprep.mubr.f32.mxu0 0.0
    %1296 = vmatmul.mubr.f32.gmra.mrb[0].mxu0 %v1229
    %v1297 = vpop.f32.mrb[0].mxu0
    %v1298 = vadd.f32 %v1226, %v1297
    %v1299 = vpop.f32.mrb[0].mxu0
    %1300 = vdwg.mxu0
    %v1301 = vmax.f32 %v1298, 0.0
    %v1302 = vld [vmem:[%s11] sm:$0xff]
    %v1303 = vld [vmem:[%s11 + $0x8] sm:$0xff]
    %v1304 = vld [vmem:[%s11 + $0x10] sm:$0xff]
    %v1305 = vld [vmem:[%s11 + $0x18] sm:$0xff]
    %v1306 = vld [vmem:[%s12] sm:$0x1]
    %v1308 = vlaneseq
    %v1309 = vshrl.u32 %v1308, 7
    %v1310 = vsub.s32 0, %v1309
    %v1311 = vrot.slane %v1306, %v1310
    %vm1313 = vcmask 261120
    %v1315 = vsel %vm1313, %v1301, 0
    %1317 = vmatprep.subr.mxu0 0.0
    %1318 = vmatpush1.msra.mxu0 %v1302
    %1319 = vmatprep.subr.mxu0 0.0
    %1320 = vmatpush1.msra.mxu0 %v1303
    %1321 = vmatprep.subr.mxu0 0.0
    %1322 = vmatpush1.msra.mxu0 %v1304
    %1323 = vmatprep.subr.mxu0 0.0
    %1324 = vmatpush1.msra.mxu0 %v1305
    %1325 = vmatprep.subr.mxu0 0.0
    %1326 = vmatpush1.msra.mxu0 0.0
    %1327 = vmatprep.subr.mxu0 0.0
    %1328 = vmatpush1.msra.mxu0 0.0
    %1329 = vmatprep.subr.mxu0 0.0
    %1330 = vmatpush1.msra.mxu0 0.0
    %1331 = vmatprep.subr.mxu0 0.0
    %1332 = vmatpush1.msra.mxu0 0.0
    %1333 = vmatprep.subr.mxu0 0.0
    %1334 = vmatpush1.msra.mxu0 0.0
    %1335 = vmatprep.subr.mxu0 0.0
    %1336 = vmatpush1.msra.mxu0 0.0
    %1337 = vmatprep.subr.mxu0 0.0
    %1338 = vmatpush1.msra.mxu0 0.0
    %1339 = vmatprep.subr.mxu0 0.0
    %1340 = vmatpush1.msra.mxu0 0.0
    %1341 = vmatprep.subr.mxu0 0.0
    %1342 = vmatpush1.msra.mxu0 0.0
    %1343 = vmatprep.subr.mxu0 0.0
    %1344 = vmatpush1.msra.mxu0 0.0
    %1345 = vmatprep.subr.mxu0 0.0
    %1346 = vmatpush1.msra.mxu0 0.0
    %1347 = vmatprep.subr.mxu0 0.0
    %1348 = vmatpush1.msra.mxu0 0.0
    %1349 = vmatprep.subr.mxu0 0.0
    %1350 = vmatpush1.msra.mxu0 0.0
    %1351 = vmatprep.subr.mxu0 0.0
    %1352 = vmatpush1.msra.mxu0 0.0
    %1353 = vmatprep.subr.mxu0 0.0
    %1354 = vmatpush1.msra.mxu0 0.0
    %1355 = vmatprep.subr.mxu0 0.0
    %1356 = vmatpush1.msra.mxu0 0.0
    %1357 = vmatprep.subr.mxu0 0.0
    %1358 = vmatpush1.msra.mxu0 0.0
    %1359 = vmatprep.subr.mxu0 0.0
    %1360 = vmatpush1.msra.mxu0 0.0
    %1361 = vmatprep.subr.mxu0 0.0
    %1362 = vmatpush1.msra.mxu0 0.0
    %1363 = vmatprep.subr.mxu0 0.0
    %1364 = vmatpush1.msra.mxu0 0.0
    %1365 = vmatprep.subr.mxu0 0.0
    %1366 = vmatpush1.msra.mxu0 0.0
    %1367 = vmatprep.subr.mxu0 0.0
    %1368 = vmatpush1.msra.mxu0 0.0
    %1369 = vmatprep.subr.mxu0 0.0
    %1370 = vmatpush1.msra.mxu0 0.0
    %1371 = vmatprep.subr.mxu0 0.0
    %1372 = vmatpush1.msra.mxu0 0.0
    %1373 = vmatprep.subr.mxu0 0.0
    %1374 = vmatpush1.msra.mxu0 0.0
    %1375 = vmatprep.subr.mxu0 0.0
    %1376 = vmatpush1.msra.mxu0 0.0
    %1377 = vmatprep.subr.mxu0 0.0
    %1378 = vmatpush1.msra.mxu0 0.0
    %1379 = vmatprep.subr.mxu0 0.0
    %1380 = vmatpush1.msra.mxu0 0.0
    %1381 = vmatprep.mubr.f32.mxu0 0.0
    %1382 = vmatmul.mubr.f32.gmra.mrb[0].mxu0 %v1315
    %v1383 = vpop.f32.mrb[0].mxu0
    %v1384 = vadd.f32 %v1311, %v1383
    %v1385 = vpop.f32.mrb[0].mxu0
    %1386 = vdwg.mxu0
    %vm1387 = vcmask 80896
    %1388 = vst.msk [vmem:[#allocation9] sm:$0xff] %vm1387, %v1384
    // Predicated region
    $region66: #{tpu_custom_call.1} parent=1 // pred_check
      _
    $region67: #{tpu_custom_call.1} parent=1 // pred_check_branch
      %1390 = sbr.rel (0) target = $region69
    $region68: #{tpu_custom_call.1} parent=1 // pred_region
      %s1392 = ssub.s32 128, 128
      %1393 = vsyncadd [#allocation5], %s1392
      %s1395 = sshll.u32 [#allocation9], 4
      %s1396 = int_to_ptr.vmem [resolvable:$true] %s1395
      %1398 = dma.vmem_to_hbm [thread:$0]  %s1396, 128, %s13, [#allocation5]
    $region69: #{tpu_custom_call.1} parent=1 // pred_fallthru
      _
    // Predicated region
    $region70: #{tpu_custom_call.1} parent=1 // pred_check
      _
    $region71: #{tpu_custom_call.1} parent=1 // pred_check_branch
      %1400 = sbr.rel (0) target = $region73
    $region72: #{tpu_custom_call.1} parent=1 // pred_region
      %1401 = dma.done [#allocation5], 128
    $region73: #{tpu_custom_call.1} parent=1 // pred_fallthru
      _
    %1402 = vsyncpa [#allocation4], 1
    %1403 = vsyncpa [#allocation7], 1
    %1404 = vsyncpa [#allocation5], 1

</llo_original>
